<compile_context>
chip_gen: v5e
topology: v5e:2x2
jax: 0.10.0
libtpu: 0.0.40
codegen_flags: <defaults>
</compile_context>

<pallas_src>
import jax
import jax.numpy as jnp
from jax import lax
from jax.experimental import pallas as pl
from jax.experimental.pallas import tpu as pltpu

# ------------------------- small synthetic BERT config -----------------------
VOCAB = 100
TYPE_VOCAB = 2
MAX_POS = 64
HIDDEN = 32            # (real BERT: 768; kept small for the synthetic kernel)
N_HEADS = 4
HEAD_DIM = HIDDEN // N_HEADS
FFN = 64
N_LAYERS = 2
CLASS_NUM = 5
PAD_CLASSES = 128      # lane-dense logits slab (>=128 lanes -> unmasked stores)
QKV_PAD = 128          # fused QKV output lanes (3*HIDDEN = 96 zero-padded to 128)
SEQ = 8
BATCH = 2
BS = BATCH * SEQ       # flattened token rows
BN = BATCH * N_HEADS   # flattened attention batch (heads x batch)
NEG_INF = -1e9
LN_EPS = 1e-12
ATT_SCALE = 1.0 / (HEAD_DIM ** 0.5)


# ------------------------------ in-kernel helpers ----------------------------
def _layer_norm(x, gamma, beta):
    mu = jnp.mean(x, axis=-1, keepdims=True)
    var = jnp.mean((x - mu) ** 2, axis=-1, keepdims=True)
    return (x - mu) * lax.rsqrt(var + LN_EPS) * gamma + beta


def _gelu(x):
    # TODO(synk): BERT uses exact erf-GELU; tanh approximation used here.
    c = 0.7978845608028654  # sqrt(2/pi)
    return 0.5 * x * (1.0 + jnp.tanh(c * (x + 0.044715 * x * x * x)))


def _split_heads(t):
    """(B*S, H) -> (N_HEADS*B, S, dh); batch index n = h*BATCH + b.
    Tile-aligned reshapes + one leading-axis concat (no transpose)."""
    return jnp.concatenate(
        [t[:, h * HEAD_DIM:(h + 1) * HEAD_DIM].reshape(BATCH, SEQ, HEAD_DIM)
         for h in range(N_HEADS)], axis=0)


def _merge_heads(t):
    """(N_HEADS*B, S, dh) head-major -> (B*S, H) with head-major columns."""
    return jnp.concatenate(
        [t[h * BATCH:(h + 1) * BATCH].reshape(BS, HEAD_DIM)
         for h in range(N_HEADS)], axis=-1)


# --------------------------------- fused kernel ------------------------------
def bert_kernel(labels_ref, emb_ref, maskb_ref,
                eg_ref, eb_ref,
                wqkv_ref, bqkv_ref, wo_ref, bo_ref, g1_ref, b1_ref,
                wi_ref, bi_ref, wf_ref, bf_ref, g2_ref, b2_ref,
                wp_ref, bp_ref, wc_ref, bc_ref,
                logits_ref, loss_ref):
    # Embedding LayerNorm; activations stay VMEM-resident for the whole model.
    x = _layer_norm(emb_ref[...], eg_ref[...], eb_ref[...])        # (BS, H) f32
    mask_bias = maskb_ref[...]                                     # (BN, 1, S), hoisted

    for l in range(N_LAYERS):                                      # static unroll
        # ---- fused QKV: one (BS,H)@(H,128) MXU matmul, bf16 in / f32 accum
        qkv = jnp.dot(x.astype(jnp.bfloat16), wqkv_ref[l],
                      preferred_element_type=jnp.float32) + bqkv_ref[l]   # (BS, 128)
        q = qkv[:, 0 * HIDDEN:1 * HIDDEN]
        k = qkv[:, 1 * HIDDEN:2 * HIDDEN]
        v = qkv[:, 2 * HIDDEN:3 * HIDDEN]

        qh = _split_heads(q)                                       # (BN, S, dh)
        kh = _split_heads(k)
        vh = _split_heads(v)

        # ---- attention: all heads in one batched contraction each
        s = jnp.einsum('nqd,nkd->nqk',
                       qh.astype(jnp.bfloat16), kh.astype(jnp.bfloat16),
                       preferred_element_type=jnp.float32) * ATT_SCALE
        s = s + mask_bias                                          # (BN, S, S)
        s = s - jnp.max(s, axis=-1, keepdims=True)
        p = jnp.exp(s)
        p = p * pl.reciprocal(jnp.sum(p, axis=-1, keepdims=True), approx=True)
        ctx = jnp.einsum('nqk,nkd->nqd',
                         p.astype(jnp.bfloat16), vh.astype(jnp.bfloat16),
                         preferred_element_type=jnp.float32)       # (BN, S, dh)

        # ---- output projection: single (BS,H)@(H,H) matmul
        attn = jnp.dot(_merge_heads(ctx).astype(jnp.bfloat16), wo_ref[l],
                       preferred_element_type=jnp.float32) + bo_ref[l]    # (BS, H)
        x = _layer_norm(x + attn, g1_ref[l], b1_ref[l])

        # ---- feed-forward
        h1 = _gelu(jnp.dot(x.astype(jnp.bfloat16), wi_ref[l],
                           preferred_element_type=jnp.float32) + bi_ref[l])
        ff = jnp.dot(h1.astype(jnp.bfloat16), wf_ref[l],
                     preferred_element_type=jnp.float32) + bf_ref[l]
        x = _layer_norm(x + ff, g2_ref[l], b2_ref[l])

    # ---- pooler + classifier ("bcls" = first token of each sequence)
    cls = x.reshape(BATCH, SEQ, HIDDEN)[:, 0, :]                   # (B, H)
    pooled = jnp.tanh(jnp.dot(cls.astype(jnp.bfloat16), wp_ref[...],
                              preferred_element_type=jnp.float32) + bp_ref[...])
    logits = jnp.dot(pooled.astype(jnp.bfloat16), wc_ref[...],
                     preferred_element_type=jnp.float32) + bc_ref[...]    # (B, 128)
    logits_ref[...] = logits                                       # lane-dense store

    # ---- CrossEntropyLoss (mean over batch); padded class lanes masked out
    col = lax.broadcasted_iota(jnp.int32, (BATCH, PAD_CLASSES), 1)
    row = lax.broadcasted_iota(jnp.int32, (BATCH, PAD_CLASSES), 0)
    lm = jnp.where(col < CLASS_NUM, logits, NEG_INF)
    m = jnp.max(lm, axis=-1, keepdims=True)
    lse = m + jnp.log(jnp.sum(jnp.exp(lm - m), axis=-1, keepdims=True))   # (B, 1)
    onehot = jnp.zeros((BATCH, PAD_CLASSES), jnp.float32)
    for b in range(BATCH):                                         # labels from SMEM
        onehot = jnp.where((row == b) & (col == labels_ref[b]), 1.0, onehot)
    picked = jnp.sum(onehot * lm, axis=-1, keepdims=True)          # (B, 1)
    loss_ref[0, 0] = jnp.sum(lse - picked) * (1.0 / BATCH)         # scalar -> SMEM


# --------------------------- parameter init / packing ------------------------
def init_params(key):
    """Raw f32 params mirroring the torch module (synthetic small BERT)."""
    keys = iter(jax.random.split(key, 128))

    def nrm(shape, scale=0.02):
        return (scale * jax.random.normal(next(keys), shape)).astype(jnp.float32)

    ones = lambda s: jnp.ones(s, jnp.float32)
    zeros = lambda s: jnp.zeros(s, jnp.float32)

    params = {
        'word_emb': nrm((VOCAB, HIDDEN)),
        'pos_emb': nrm((MAX_POS, HIDDEN)),
        'type_emb': nrm((TYPE_VOCAB, HIDDEN)),
        'emb_ln_g': ones((1, HIDDEN)), 'emb_ln_b': zeros((1, HIDDEN)),
        'wp': nrm((HIDDEN, HIDDEN)), 'bp': zeros((1, HIDDEN)),         # pooler
        'wc': nrm((HIDDEN, CLASS_NUM)), 'bc': zeros((1, CLASS_NUM)),   # self.fc
        'layers': [],
    }
    for _ in range(N_LAYERS):
        params['layers'].append({
            'wq': nrm((HIDDEN, HIDDEN)), 'bq': zeros((1, HIDDEN)),
            'wk': nrm((HIDDEN, HIDDEN)), 'bk': zeros((1, HIDDEN)),
            'wv': nrm((HIDDEN, HIDDEN)), 'bv': zeros((1, HIDDEN)),
            'wo': nrm((HIDDEN, HIDDEN)), 'bo': zeros((1, HIDDEN)),
            'ln1_g': ones((1, HIDDEN)), 'ln1_b': zeros((1, HIDDEN)),
            'w_in': nrm((HIDDEN, FFN)), 'b_in': zeros((1, FFN)),
            'w_out': nrm((FFN, HIDDEN)), 'b_out': zeros((1, HIDDEN)),
            'ln2_g': ones((1, HIDDEN)), 'ln2_b': zeros((1, HIDDEN)),
        })
    return params


def pack_params(raw):
    """One-time repack into kernel layout: layer-stacked weights, fused+padded
    QKV, padded classifier, bf16 matmul weights (biases / LN params stay f32)."""
    L = raw['layers']
    bf16 = jnp.bfloat16

    def stack(k, dt=jnp.float32):
        return jnp.stack([lp[k] for lp in L]).astype(dt)

    wqkv = jnp.stack([
        jnp.pad(jnp.concatenate([lp['wq'], lp['wk'], lp['wv']], axis=1),
                ((0, 0), (0, QKV_PAD - 3 * HIDDEN)))
        for lp in L]).astype(bf16)                                   # (L, H, 128)
    bqkv = jnp.stack([
        jnp.pad(jnp.concatenate([lp['bq'], lp['bk'], lp['bv']], axis=1),
                ((0, 0), (0, QKV_PAD - 3 * HIDDEN)))
        for lp in L])                                                # (L, 1, 128) f32

    return {
        'word_emb': raw['word_emb'], 'pos_emb': raw['pos_emb'],
        'type_emb': raw['type_emb'],
        'emb_ln_g': raw['emb_ln_g'], 'emb_ln_b': raw['emb_ln_b'],
        'wqkv': wqkv, 'bqkv': bqkv,
        'wo': stack('wo', bf16), 'bo': stack('bo'),
        'g1': stack('ln1_g'), 'b1': stack('ln1_b'),
        'wi': stack('w_in', bf16), 'bi': stack('b_in'),
        'wf': stack('w_out', bf16), 'bf': stack('b_out'),
        'g2': stack('ln2_g'), 'b2': stack('ln2_b'),
        'wp': raw['wp'].astype(bf16), 'bp': raw['bp'],
        'wc': jnp.pad(raw['wc'], ((0, 0), (0, PAD_CLASSES - CLASS_NUM))).astype(bf16),
        'bc': jnp.pad(raw['bc'], ((0, 0), (0, PAD_CLASSES - CLASS_NUM))),
    }


# ------------------------------- wrapper / glue -------------------------------
@jax.jit
def bert_forward(packed, input_ids, attention_mask, labels):
    B, S = input_ids.shape

    # Embedding gather (glue, outside the kernel).
    # TODO(synk): token_type_ids assumed all-zero (segment ids unused).
    emb = (packed['word_emb'][input_ids]
           + packed['pos_emb'][:S][None, :, :]
           + packed['type_emb'][0][None, None, :])
    emb2 = emb.astype(jnp.float32).reshape(B * S, HIDDEN)

    # Additive attention-mask bias, (N_HEADS*B, 1, S), head-major batch order
    # to match _split_heads' concatenation order inside the kernel.
    mb = (1.0 - attention_mask.astype(jnp.float32)) * NEG_INF        # (B, S)
    mask_bias = jnp.broadcast_to(
        mb[None, :, None, :], (N_HEADS, B, 1, S)).reshape(N_HEADS * B, 1, S)

    labels1d = labels.astype(jnp.int32)                              # (B,) -> SMEM

    kernel_inputs = (
        labels1d, emb2, mask_bias,
        packed['emb_ln_g'], packed['emb_ln_b'],
        packed['wqkv'], packed['bqkv'], packed['wo'], packed['bo'],
        packed['g1'], packed['b1'],
        packed['wi'], packed['bi'], packed['wf'], packed['bf'],
        packed['g2'], packed['b2'],
        packed['wp'], packed['bp'], packed['wc'], packed['bc'])

    vmem = pl.BlockSpec(memory_space=pltpu.MemorySpace.VMEM)
    smem = pl.BlockSpec(memory_space=pltpu.MemorySpace.SMEM)
    in_specs = [smem] + [vmem] * (len(kernel_inputs) - 1)

    # Grid-less single invocation: the whole (B*S, H) = (16, 32) activation is
    # one block at this toy size.
    # TODO(synk): at real BERT scale, add a grid ("parallel" batch tiles x
    # "arbitrary" layer axis) streaming bf16 layer weights per step so the
    # design fits v7x's 64 MiB VMEM and uses both TensorCores.
    logits_pad, loss = pl.pallas_call(
        bert_kernel,
        out_shape=(jax.ShapeDtypeStruct((B, PAD_CLASSES), jnp.float32),
                   jax.ShapeDtypeStruct((1, 1), jnp.float32)),
        in_specs=in_specs,
        out_specs=(vmem, smem),
    )(*kernel_inputs)

    logits = logits_pad[:, :CLASS_NUM]
    preds = jnp.argmax(logits, axis=-1)
    # TODO(synk): original calls external single_label_top1_accuracy with a
    # stateful acc_result; simplified to total/right counts here.
    acc_result = {'total': jnp.asarray(B, jnp.int32),
                  'right': jnp.sum((preds == labels).astype(jnp.int32))}
    return {'loss': loss[0, 0], 'acc_result': acc_result, 'logits': logits}


# ----------------------------------- main -------------------------------------
if __name__ == "__main__":
    root = jax.random.PRNGKey(0)
    k_param, k_ids, k_lbl = jax.random.split(root, 3)

    packed = pack_params(init_params(k_param))
    input_ids = jax.random.randint(k_ids, (BATCH, SEQ), 0, VOCAB, dtype=jnp.int32)
    attention_mask = jnp.ones((BATCH, SEQ), jnp.float32).at[1, 6:].set(0.0)
    labels = jax.random.randint(k_lbl, (BATCH,), 0, CLASS_NUM, dtype=jnp.int32)

    out = bert_forward(packed, input_ids, attention_mask, labels)
    jax.block_until_ready(out['loss'])
    jax.block_until_ready(out['logits'])
    print("KERNEL_OK")
</pallas_src>

<mosaic_0001>
module attributes {stable_mosaic.version = 11 : i64} {
  func.func @bert_kernel(%arg0: memref<2xi32, #tpu.memory_space<smem>>, %arg1: memref<16x32xf32, #tpu.memory_space<vmem>>, %arg2: memref<8x1x8xf32, #tpu.memory_space<vmem>>, %arg3: memref<1x32xf32, #tpu.memory_space<vmem>>, %arg4: memref<1x32xf32, #tpu.memory_space<vmem>>, %arg5: memref<2x32x128xbf16, #tpu.memory_space<vmem>>, %arg6: memref<2x1x128xf32, #tpu.memory_space<vmem>>, %arg7: memref<2x32x32xbf16, #tpu.memory_space<vmem>>, %arg8: memref<2x1x32xf32, #tpu.memory_space<vmem>>, %arg9: memref<2x1x32xf32, #tpu.memory_space<vmem>>, %arg10: memref<2x1x32xf32, #tpu.memory_space<vmem>>, %arg11: memref<2x32x64xbf16, #tpu.memory_space<vmem>>, %arg12: memref<2x1x64xf32, #tpu.memory_space<vmem>>, %arg13: memref<2x64x32xbf16, #tpu.memory_space<vmem>>, %arg14: memref<2x1x32xf32, #tpu.memory_space<vmem>>, %arg15: memref<2x1x32xf32, #tpu.memory_space<vmem>>, %arg16: memref<2x1x32xf32, #tpu.memory_space<vmem>>, %arg17: memref<32x32xbf16, #tpu.memory_space<vmem>>, %arg18: memref<1x32xf32, #tpu.memory_space<vmem>>, %arg19: memref<32x128xbf16, #tpu.memory_space<vmem>>, %arg20: memref<1x128xf32, #tpu.memory_space<vmem>>, %arg21: memref<2x128xf32, #tpu.memory_space<vmem>>, %arg22: memref<1x1xf32, #tpu.memory_space<smem>>) attributes {dimension_semantics = [], scalar_prefetch = 0 : i64, scratch_operands = 0 : i64, tpu.core_type = #tpu.core_type<tc>} {
    %c0 = arith.constant 0 : index
    %c0_0 = arith.constant 0 : index
    %0 = vector.load %arg1[%c0, %c0_0] : memref<16x32xf32, #tpu.memory_space<vmem>>, vector<16x32xf32>
    %c0_1 = arith.constant 0 : index
    %c0_2 = arith.constant 0 : index
    %1 = vector.load %arg3[%c0_1, %c0_2] : memref<1x32xf32, #tpu.memory_space<vmem>>, vector<1x32xf32>
    %c0_3 = arith.constant 0 : index
    %c0_4 = arith.constant 0 : index
    %2 = vector.load %arg4[%c0_3, %c0_4] : memref<1x32xf32, #tpu.memory_space<vmem>>, vector<1x32xf32>
    %cst = arith.constant dense<0.000000e+00> : vector<16xf32>
    %3 = vector.multi_reduction <add>, %0, %cst [1] : vector<16x32xf32> to vector<16xf32>
    %4 = vector.shape_cast %3 : vector<16xf32> to vector<16x1xf32>
    %cst_5 = arith.constant 3.200000e+01 : f32
    %5 = vector.broadcast %cst_5 : f32 to vector<16x1xf32>
    %6 = arith.divf %4, %5 : vector<16x1xf32>
    %7 = vector.broadcast %6 : vector<16x1xf32> to vector<16x32xf32>
    %8 = arith.subf %0, %7 : vector<16x32xf32>
    %9 = arith.mulf %8, %8 : vector<16x32xf32>
    %cst_6 = arith.constant dense<0.000000e+00> : vector<16xf32>
    %10 = vector.multi_reduction <add>, %9, %cst_6 [1] : vector<16x32xf32> to vector<16xf32>
    %11 = vector.shape_cast %10 : vector<16xf32> to vector<16x1xf32>
    %cst_7 = arith.constant 3.200000e+01 : f32
    %12 = vector.broadcast %cst_7 : f32 to vector<16x1xf32>
    %13 = arith.divf %11, %12 : vector<16x1xf32>
    %14 = vector.broadcast %6 : vector<16x1xf32> to vector<16x32xf32>
    %15 = arith.subf %0, %14 : vector<16x32xf32>
    %cst_8 = arith.constant 9.99999996E-13 : f32
    %16 = vector.broadcast %cst_8 : f32 to vector<16x1xf32>
    %17 = arith.addf %13, %16 : vector<16x1xf32>
    %18 = math.rsqrt %17 : vector<16x1xf32>
    %19 = vector.broadcast %18 : vector<16x1xf32> to vector<16x32xf32>
    %20 = arith.mulf %15, %19 : vector<16x32xf32>
    %21 = vector.broadcast %1 : vector<1x32xf32> to vector<16x32xf32>
    %22 = arith.mulf %20, %21 : vector<16x32xf32>
    %23 = vector.broadcast %2 : vector<1x32xf32> to vector<16x32xf32>
    %24 = arith.addf %22, %23 : vector<16x32xf32>
    %c0_9 = arith.constant 0 : index
    %c0_10 = arith.constant 0 : index
    %c0_11 = arith.constant 0 : index
    %25 = vector.load %arg2[%c0_9, %c0_10, %c0_11] : memref<8x1x8xf32, #tpu.memory_space<vmem>>, vector<8x1x8xf32>
    %26 = arith.truncf %24 : vector<16x32xf32> to vector<16x32xbf16>
    %c0_12 = arith.constant 0 : index
    %c0_13 = arith.constant 0 : index
    %c0_14 = arith.constant 0 : index
    %27 = vector.load %arg5[%c0_12, %c0_13, %c0_14] : memref<2x32x128xbf16, #tpu.memory_space<vmem>>, vector<1x32x128xbf16>
    %28 = vector.shape_cast %27 : vector<1x32x128xbf16> to vector<32x128xbf16>
    %cst_15 = arith.constant dense<0.000000e+00> : vector<16x128xf32>
    %29 = tpu.matmul %26, %28, %cst_15 {dimension_numbers = #tpu.dot_dimension_numbers<[1], [0], [0], [1], [0, 0, 1, 1], [], []>} : vector<16x32xbf16>, vector<32x128xbf16>, vector<16x128xf32> -> vector<16x128xf32>
    %c0_16 = arith.constant 0 : index
    %c0_17 = arith.constant 0 : index
    %c0_18 = arith.constant 0 : index
    %30 = vector.load %arg6[%c0_16, %c0_17, %c0_18] : memref<2x1x128xf32, #tpu.memory_space<vmem>>, vector<1x1x128xf32>
    %31 = vector.shape_cast %30 : vector<1x1x128xf32> to vector<1x128xf32>
    %32 = vector.broadcast %31 : vector<1x128xf32> to vector<16x128xf32>
    %33 = arith.addf %29, %32 : vector<16x128xf32>
    %34 = vector.extract_strided_slice %33 {offsets = [0, 0], sizes = [16, 32], strides = [1, 1]} : vector<16x128xf32> to vector<16x32xf32>
    %35 = vector.extract_strided_slice %33 {offsets = [0, 32], sizes = [16, 32], strides = [1, 1]} : vector<16x128xf32> to vector<16x32xf32>
    %36 = vector.extract_strided_slice %33 {offsets = [0, 64], sizes = [16, 32], strides = [1, 1]} : vector<16x128xf32> to vector<16x32xf32>
    %37 = vector.extract_strided_slice %34 {offsets = [0, 0], sizes = [16, 8], strides = [1, 1]} : vector<16x32xf32> to vector<16x8xf32>
    %38 = vector.shape_cast %37 : vector<16x8xf32> to vector<2x8x8xf32>
    %39 = vector.extract_strided_slice %34 {offsets = [0, 8], sizes = [16, 8], strides = [1, 1]} : vector<16x32xf32> to vector<16x8xf32>
    %40 = vector.shape_cast %39 : vector<16x8xf32> to vector<2x8x8xf32>
    %41 = vector.extract_strided_slice %34 {offsets = [0, 16], sizes = [16, 8], strides = [1, 1]} : vector<16x32xf32> to vector<16x8xf32>
    %42 = vector.shape_cast %41 : vector<16x8xf32> to vector<2x8x8xf32>
    %43 = vector.extract_strided_slice %34 {offsets = [0, 24], sizes = [16, 8], strides = [1, 1]} : vector<16x32xf32> to vector<16x8xf32>
    %44 = vector.shape_cast %43 : vector<16x8xf32> to vector<2x8x8xf32>
    %45 = tpu.concatenate %38, %40, %42, %44 in 0 : vector<2x8x8xf32>, vector<2x8x8xf32>, vector<2x8x8xf32>, vector<2x8x8xf32> -> vector<8x8x8xf32>
    %46 = vector.extract_strided_slice %35 {offsets = [0, 0], sizes = [16, 8], strides = [1, 1]} : vector<16x32xf32> to vector<16x8xf32>
    %47 = vector.shape_cast %46 : vector<16x8xf32> to vector<2x8x8xf32>
    %48 = vector.extract_strided_slice %35 {offsets = [0, 8], sizes = [16, 8], strides = [1, 1]} : vector<16x32xf32> to vector<16x8xf32>
    %49 = vector.shape_cast %48 : vector<16x8xf32> to vector<2x8x8xf32>
    %50 = vector.extract_strided_slice %35 {offsets = [0, 16], sizes = [16, 8], strides = [1, 1]} : vector<16x32xf32> to vector<16x8xf32>
    %51 = vector.shape_cast %50 : vector<16x8xf32> to vector<2x8x8xf32>
    %52 = vector.extract_strided_slice %35 {offsets = [0, 24], sizes = [16, 8], strides = [1, 1]} : vector<16x32xf32> to vector<16x8xf32>
    %53 = vector.shape_cast %52 : vector<16x8xf32> to vector<2x8x8xf32>
    %54 = tpu.concatenate %47, %49, %51, %53 in 0 : vector<2x8x8xf32>, vector<2x8x8xf32>, vector<2x8x8xf32>, vector<2x8x8xf32> -> vector<8x8x8xf32>
    %55 = vector.extract_strided_slice %36 {offsets = [0, 0], sizes = [16, 8], strides = [1, 1]} : vector<16x32xf32> to vector<16x8xf32>
    %56 = vector.shape_cast %55 : vector<16x8xf32> to vector<2x8x8xf32>
    %57 = vector.extract_strided_slice %36 {offsets = [0, 8], sizes = [16, 8], strides = [1, 1]} : vector<16x32xf32> to vector<16x8xf32>
    %58 = vector.shape_cast %57 : vector<16x8xf32> to vector<2x8x8xf32>
    %59 = vector.extract_strided_slice %36 {offsets = [0, 16], sizes = [16, 8], strides = [1, 1]} : vector<16x32xf32> to vector<16x8xf32>
    %60 = vector.shape_cast %59 : vector<16x8xf32> to vector<2x8x8xf32>
    %61 = vector.extract_strided_slice %36 {offsets = [0, 24], sizes = [16, 8], strides = [1, 1]} : vector<16x32xf32> to vector<16x8xf32>
    %62 = vector.shape_cast %61 : vector<16x8xf32> to vector<2x8x8xf32>
    %63 = tpu.concatenate %56, %58, %60, %62 in 0 : vector<2x8x8xf32>, vector<2x8x8xf32>, vector<2x8x8xf32>, vector<2x8x8xf32> -> vector<8x8x8xf32>
    %64 = arith.truncf %45 : vector<8x8x8xf32> to vector<8x8x8xbf16>
    %65 = arith.truncf %54 : vector<8x8x8xf32> to vector<8x8x8xbf16>
    "tpu.trace_start"() <{level = 10 : i32, message = "nqd,nkd->nqk"}> : () -> ()
    %cst_19 = arith.constant dense<0.000000e+00> : vector<8x8x8xf32>
    %66 = tpu.matmul %64, %65, %cst_19 {dimension_numbers = #tpu.dot_dimension_numbers<[2], [2], [1], [1], [0, 0, 0, 1, 1, 1], [0], [0]>} : vector<8x8x8xbf16>, vector<8x8x8xbf16>, vector<8x8x8xf32> -> vector<8x8x8xf32>
    "tpu.trace_stop"() : () -> ()
    %cst_20 = arith.constant 0.353553385 : f32
    %67 = vector.broadcast %cst_20 : f32 to vector<8x8x8xf32>
    %68 = arith.mulf %66, %67 : vector<8x8x8xf32>
    %69 = vector.broadcast %25 : vector<8x1x8xf32> to vector<8x8x8xf32>
    %70 = arith.addf %68, %69 : vector<8x8x8xf32>
    %cst_21 = arith.constant dense<0xFF800000> : vector<8x8xf32>
    %71 = vector.multi_reduction <maximumf>, %70, %cst_21 [2] : vector<8x8x8xf32> to vector<8x8xf32>
    %72 = vector.shape_cast %71 : vector<8x8xf32> to vector<8x8x1xf32>
    %73 = vector.broadcast %72 : vector<8x8x1xf32> to vector<8x8x8xf32>
    %74 = arith.subf %70, %73 : vector<8x8x8xf32>
    %75 = math.exp %74 : vector<8x8x8xf32>
    %cst_22 = arith.constant dense<0.000000e+00> : vector<8x8xf32>
    %76 = vector.multi_reduction <add>, %75, %cst_22 [2] : vector<8x8x8xf32> to vector<8x8xf32>
    %77 = vector.shape_cast %76 : vector<8x8xf32> to vector<8x8x1xf32>
    %78 = tpu.reciprocal %77 {approx = true} : vector<8x8x1xf32> -> vector<8x8x1xf32>
    %79 = vector.broadcast %78 : vector<8x8x1xf32> to vector<8x8x8xf32>
    %80 = arith.mulf %75, %79 : vector<8x8x8xf32>
    %81 = arith.truncf %80 : vector<8x8x8xf32> to vector<8x8x8xbf16>
    %82 = arith.truncf %63 : vector<8x8x8xf32> to vector<8x8x8xbf16>
    "tpu.trace_start"() <{level = 10 : i32, message = "nqk,nkd->nqd"}> : () -> ()
    %cst_23 = arith.constant dense<0.000000e+00> : vector<8x8x8xf32>
    %83 = tpu.matmul %81, %82, %cst_23 {dimension_numbers = #tpu.dot_dimension_numbers<[2], [1], [1], [2], [0, 0, 0, 1, 1, 2], [0], [0]>} : vector<8x8x8xbf16>, vector<8x8x8xbf16>, vector<8x8x8xf32> -> vector<8x8x8xf32>
    "tpu.trace_stop"() : () -> ()
    %84 = vector.extract_strided_slice %83 {offsets = [0, 0, 0], sizes = [2, 8, 8], strides = [1, 1, 1]} : vector<8x8x8xf32> to vector<2x8x8xf32>
    %85 = vector.shape_cast %84 : vector<2x8x8xf32> to vector<16x8xf32>
    %86 = vector.extract_strided_slice %83 {offsets = [2, 0, 0], sizes = [2, 8, 8], strides = [1, 1, 1]} : vector<8x8x8xf32> to vector<2x8x8xf32>
    %87 = vector.shape_cast %86 : vector<2x8x8xf32> to vector<16x8xf32>
    %88 = vector.extract_strided_slice %83 {offsets = [4, 0, 0], sizes = [2, 8, 8], strides = [1, 1, 1]} : vector<8x8x8xf32> to vector<2x8x8xf32>
    %89 = vector.shape_cast %88 : vector<2x8x8xf32> to vector<16x8xf32>
    %90 = vector.extract_strided_slice %83 {offsets = [6, 0, 0], sizes = [2, 8, 8], strides = [1, 1, 1]} : vector<8x8x8xf32> to vector<2x8x8xf32>
    %91 = vector.shape_cast %90 : vector<2x8x8xf32> to vector<16x8xf32>
    %92 = tpu.concatenate %85, %87, %89, %91 in 1 : vector<16x8xf32>, vector<16x8xf32>, vector<16x8xf32>, vector<16x8xf32> -> vector<16x32xf32>
    %93 = arith.truncf %92 : vector<16x32xf32> to vector<16x32xbf16>
    %c0_24 = arith.constant 0 : index
    %c0_25 = arith.constant 0 : index
    %c0_26 = arith.constant 0 : index
    %94 = vector.load %arg7[%c0_24, %c0_25, %c0_26] : memref<2x32x32xbf16, #tpu.memory_space<vmem>>, vector<1x32x32xbf16>
    %95 = vector.shape_cast %94 : vector<1x32x32xbf16> to vector<32x32xbf16>
    %cst_27 = arith.constant dense<0.000000e+00> : vector<16x32xf32>
    %96 = tpu.matmul %93, %95, %cst_27 {dimension_numbers = #tpu.dot_dimension_numbers<[1], [0], [0], [1], [0, 0, 1, 1], [], []>} : vector<16x32xbf16>, vector<32x32xbf16>, vector<16x32xf32> -> vector<16x32xf32>
    %c0_28 = arith.constant 0 : index
    %c0_29 = arith.constant 0 : index
    %c0_30 = arith.constant 0 : index
    %97 = vector.load %arg8[%c0_28, %c0_29, %c0_30] : memref<2x1x32xf32, #tpu.memory_space<vmem>>, vector<1x1x32xf32>
    %98 = vector.shape_cast %97 : vector<1x1x32xf32> to vector<1x32xf32>
    %99 = vector.broadcast %98 : vector<1x32xf32> to vector<16x32xf32>
    %100 = arith.addf %96, %99 : vector<16x32xf32>
    %101 = arith.addf %24, %100 : vector<16x32xf32>
    %c0_31 = arith.constant 0 : index
    %c0_32 = arith.constant 0 : index
    %c0_33 = arith.constant 0 : index
    %102 = vector.load %arg9[%c0_31, %c0_32, %c0_33] : memref<2x1x32xf32, #tpu.memory_space<vmem>>, vector<1x1x32xf32>
    %103 = vector.shape_cast %102 : vector<1x1x32xf32> to vector<1x32xf32>
    %c0_34 = arith.constant 0 : index
    %c0_35 = arith.constant 0 : index
    %c0_36 = arith.constant 0 : index
    %104 = vector.load %arg10[%c0_34, %c0_35, %c0_36] : memref<2x1x32xf32, #tpu.memory_space<vmem>>, vector<1x1x32xf32>
    %105 = vector.shape_cast %104 : vector<1x1x32xf32> to vector<1x32xf32>
    %cst_37 = arith.constant dense<0.000000e+00> : vector<16xf32>
    %106 = vector.multi_reduction <add>, %101, %cst_37 [1] : vector<16x32xf32> to vector<16xf32>
    %107 = vector.shape_cast %106 : vector<16xf32> to vector<16x1xf32>
    %cst_38 = arith.constant 3.200000e+01 : f32
    %108 = vector.broadcast %cst_38 : f32 to vector<16x1xf32>
    %109 = arith.divf %107, %108 : vector<16x1xf32>
    %110 = vector.broadcast %109 : vector<16x1xf32> to vector<16x32xf32>
    %111 = arith.subf %101, %110 : vector<16x32xf32>
    %112 = arith.mulf %111, %111 : vector<16x32xf32>
    %cst_39 = arith.constant dense<0.000000e+00> : vector<16xf32>
    %113 = vector.multi_reduction <add>, %112, %cst_39 [1] : vector<16x32xf32> to vector<16xf32>
    %114 = vector.shape_cast %113 : vector<16xf32> to vector<16x1xf32>
    %cst_40 = arith.constant 3.200000e+01 : f32
    %115 = vector.broadcast %cst_40 : f32 to vector<16x1xf32>
    %116 = arith.divf %114, %115 : vector<16x1xf32>
    %117 = vector.broadcast %109 : vector<16x1xf32> to vector<16x32xf32>
    %118 = arith.subf %101, %117 : vector<16x32xf32>
    %cst_41 = arith.constant 9.99999996E-13 : f32
    %119 = vector.broadcast %cst_41 : f32 to vector<16x1xf32>
    %120 = arith.addf %116, %119 : vector<16x1xf32>
    %121 = math.rsqrt %120 : vector<16x1xf32>
    %122 = vector.broadcast %121 : vector<16x1xf32> to vector<16x32xf32>
    %123 = arith.mulf %118, %122 : vector<16x32xf32>
    %124 = vector.broadcast %103 : vector<1x32xf32> to vector<16x32xf32>
    %125 = arith.mulf %123, %124 : vector<16x32xf32>
    %126 = vector.broadcast %105 : vector<1x32xf32> to vector<16x32xf32>
    %127 = arith.addf %125, %126 : vector<16x32xf32>
    %128 = arith.truncf %127 : vector<16x32xf32> to vector<16x32xbf16>
    %c0_42 = arith.constant 0 : index
    %c0_43 = arith.constant 0 : index
    %c0_44 = arith.constant 0 : index
    %129 = vector.load %arg11[%c0_42, %c0_43, %c0_44] : memref<2x32x64xbf16, #tpu.memory_space<vmem>>, vector<1x32x64xbf16>
    %130 = vector.shape_cast %129 : vector<1x32x64xbf16> to vector<32x64xbf16>
    %cst_45 = arith.constant dense<0.000000e+00> : vector<16x64xf32>
    %131 = tpu.matmul %128, %130, %cst_45 {dimension_numbers = #tpu.dot_dimension_numbers<[1], [0], [0], [1], [0, 0, 1, 1], [], []>} : vector<16x32xbf16>, vector<32x64xbf16>, vector<16x64xf32> -> vector<16x64xf32>
    %c0_46 = arith.constant 0 : index
    %c0_47 = arith.constant 0 : index
    %c0_48 = arith.constant 0 : index
    %132 = vector.load %arg12[%c0_46, %c0_47, %c0_48] : memref<2x1x64xf32, #tpu.memory_space<vmem>>, vector<1x1x64xf32>
    %133 = vector.shape_cast %132 : vector<1x1x64xf32> to vector<1x64xf32>
    %134 = vector.broadcast %133 : vector<1x64xf32> to vector<16x64xf32>
    %135 = arith.addf %131, %134 : vector<16x64xf32>
    %cst_49 = arith.constant 5.000000e-01 : f32
    %136 = vector.broadcast %cst_49 : f32 to vector<16x64xf32>
    %137 = arith.mulf %136, %135 : vector<16x64xf32>
    %cst_50 = arith.constant 4.471500e-02 : f32
    %138 = vector.broadcast %cst_50 : f32 to vector<16x64xf32>
    %139 = arith.mulf %138, %135 : vector<16x64xf32>
    %140 = arith.mulf %139, %135 : vector<16x64xf32>
    %141 = arith.mulf %140, %135 : vector<16x64xf32>
    %142 = arith.addf %135, %141 : vector<16x64xf32>
    %cst_51 = arith.constant 0.797884583 : f32
    %143 = vector.broadcast %cst_51 : f32 to vector<16x64xf32>
    %144 = arith.mulf %143, %142 : vector<16x64xf32>
    %145 = math.tanh %144 : vector<16x64xf32>
    %cst_52 = arith.constant 1.000000e+00 : f32
    %146 = vector.broadcast %cst_52 : f32 to vector<16x64xf32>
    %147 = arith.addf %146, %145 : vector<16x64xf32>
    %148 = arith.mulf %137, %147 : vector<16x64xf32>
    %149 = arith.truncf %148 : vector<16x64xf32> to vector<16x64xbf16>
    %c0_53 = arith.constant 0 : index
    %c0_54 = arith.constant 0 : index
    %c0_55 = arith.constant 0 : index
    %150 = vector.load %arg13[%c0_53, %c0_54, %c0_55] : memref<2x64x32xbf16, #tpu.memory_space<vmem>>, vector<1x64x32xbf16>
    %151 = vector.shape_cast %150 : vector<1x64x32xbf16> to vector<64x32xbf16>
    %cst_56 = arith.constant dense<0.000000e+00> : vector<16x32xf32>
    %152 = tpu.matmul %149, %151, %cst_56 {dimension_numbers = #tpu.dot_dimension_numbers<[1], [0], [0], [1], [0, 0, 1, 1], [], []>} : vector<16x64xbf16>, vector<64x32xbf16>, vector<16x32xf32> -> vector<16x32xf32>
    %c0_57 = arith.constant 0 : index
    %c0_58 = arith.constant 0 : index
    %c0_59 = arith.constant 0 : index
    %153 = vector.load %arg14[%c0_57, %c0_58, %c0_59] : memref<2x1x32xf32, #tpu.memory_space<vmem>>, vector<1x1x32xf32>
    %154 = vector.shape_cast %153 : vector<1x1x32xf32> to vector<1x32xf32>
    %155 = vector.broadcast %154 : vector<1x32xf32> to vector<16x32xf32>
    %156 = arith.addf %152, %155 : vector<16x32xf32>
    %157 = arith.addf %127, %156 : vector<16x32xf32>
    %c0_60 = arith.constant 0 : index
    %c0_61 = arith.constant 0 : index
    %c0_62 = arith.constant 0 : index
    %158 = vector.load %arg15[%c0_60, %c0_61, %c0_62] : memref<2x1x32xf32, #tpu.memory_space<vmem>>, vector<1x1x32xf32>
    %159 = vector.shape_cast %158 : vector<1x1x32xf32> to vector<1x32xf32>
    %c0_63 = arith.constant 0 : index
    %c0_64 = arith.constant 0 : index
    %c0_65 = arith.constant 0 : index
    %160 = vector.load %arg16[%c0_63, %c0_64, %c0_65] : memref<2x1x32xf32, #tpu.memory_space<vmem>>, vector<1x1x32xf32>
    %161 = vector.shape_cast %160 : vector<1x1x32xf32> to vector<1x32xf32>
    %cst_66 = arith.constant dense<0.000000e+00> : vector<16xf32>
    %162 = vector.multi_reduction <add>, %157, %cst_66 [1] : vector<16x32xf32> to vector<16xf32>
    %163 = vector.shape_cast %162 : vector<16xf32> to vector<16x1xf32>
    %cst_67 = arith.constant 3.200000e+01 : f32
    %164 = vector.broadcast %cst_67 : f32 to vector<16x1xf32>
    %165 = arith.divf %163, %164 : vector<16x1xf32>
    %166 = vector.broadcast %165 : vector<16x1xf32> to vector<16x32xf32>
    %167 = arith.subf %157, %166 : vector<16x32xf32>
    %168 = arith.mulf %167, %167 : vector<16x32xf32>
    %cst_68 = arith.constant dense<0.000000e+00> : vector<16xf32>
    %169 = vector.multi_reduction <add>, %168, %cst_68 [1] : vector<16x32xf32> to vector<16xf32>
    %170 = vector.shape_cast %169 : vector<16xf32> to vector<16x1xf32>
    %cst_69 = arith.constant 3.200000e+01 : f32
    %171 = vector.broadcast %cst_69 : f32 to vector<16x1xf32>
    %172 = arith.divf %170, %171 : vector<16x1xf32>
    %173 = vector.broadcast %165 : vector<16x1xf32> to vector<16x32xf32>
    %174 = arith.subf %157, %173 : vector<16x32xf32>
    %cst_70 = arith.constant 9.99999996E-13 : f32
    %175 = vector.broadcast %cst_70 : f32 to vector<16x1xf32>
    %176 = arith.addf %172, %175 : vector<16x1xf32>
    %177 = math.rsqrt %176 : vector<16x1xf32>
    %178 = vector.broadcast %177 : vector<16x1xf32> to vector<16x32xf32>
    %179 = arith.mulf %174, %178 : vector<16x32xf32>
    %180 = vector.broadcast %159 : vector<1x32xf32> to vector<16x32xf32>
    %181 = arith.mulf %179, %180 : vector<16x32xf32>
    %182 = vector.broadcast %161 : vector<1x32xf32> to vector<16x32xf32>
    %183 = arith.addf %181, %182 : vector<16x32xf32>
    %184 = arith.truncf %183 : vector<16x32xf32> to vector<16x32xbf16>
    %c1 = arith.constant 1 : index
    %c0_71 = arith.constant 0 : index
    %c0_72 = arith.constant 0 : index
    %185 = vector.load %arg5[%c1, %c0_71, %c0_72] : memref<2x32x128xbf16, #tpu.memory_space<vmem>>, vector<1x32x128xbf16>
    %186 = vector.shape_cast %185 : vector<1x32x128xbf16> to vector<32x128xbf16>
    %cst_73 = arith.constant dense<0.000000e+00> : vector<16x128xf32>
    %187 = tpu.matmul %184, %186, %cst_73 {dimension_numbers = #tpu.dot_dimension_numbers<[1], [0], [0], [1], [0, 0, 1, 1], [], []>} : vector<16x32xbf16>, vector<32x128xbf16>, vector<16x128xf32> -> vector<16x128xf32>
    %c1_74 = arith.constant 1 : index
    %c0_75 = arith.constant 0 : index
    %c0_76 = arith.constant 0 : index
    %188 = vector.load %arg6[%c1_74, %c0_75, %c0_76] : memref<2x1x128xf32, #tpu.memory_space<vmem>>, vector<1x1x128xf32>
    %189 = vector.shape_cast %188 : vector<1x1x128xf32> to vector<1x128xf32>
    %190 = vector.broadcast %189 : vector<1x128xf32> to vector<16x128xf32>
    %191 = arith.addf %187, %190 : vector<16x128xf32>
    %192 = vector.extract_strided_slice %191 {offsets = [0, 0], sizes = [16, 32], strides = [1, 1]} : vector<16x128xf32> to vector<16x32xf32>
    %193 = vector.extract_strided_slice %191 {offsets = [0, 32], sizes = [16, 32], strides = [1, 1]} : vector<16x128xf32> to vector<16x32xf32>
    %194 = vector.extract_strided_slice %191 {offsets = [0, 64], sizes = [16, 32], strides = [1, 1]} : vector<16x128xf32> to vector<16x32xf32>
    %195 = vector.extract_strided_slice %192 {offsets = [0, 0], sizes = [16, 8], strides = [1, 1]} : vector<16x32xf32> to vector<16x8xf32>
    %196 = vector.shape_cast %195 : vector<16x8xf32> to vector<2x8x8xf32>
    %197 = vector.extract_strided_slice %192 {offsets = [0, 8], sizes = [16, 8], strides = [1, 1]} : vector<16x32xf32> to vector<16x8xf32>
    %198 = vector.shape_cast %197 : vector<16x8xf32> to vector<2x8x8xf32>
    %199 = vector.extract_strided_slice %192 {offsets = [0, 16], sizes = [16, 8], strides = [1, 1]} : vector<16x32xf32> to vector<16x8xf32>
    %200 = vector.shape_cast %199 : vector<16x8xf32> to vector<2x8x8xf32>
    %201 = vector.extract_strided_slice %192 {offsets = [0, 24], sizes = [16, 8], strides = [1, 1]} : vector<16x32xf32> to vector<16x8xf32>
    %202 = vector.shape_cast %201 : vector<16x8xf32> to vector<2x8x8xf32>
    %203 = tpu.concatenate %196, %198, %200, %202 in 0 : vector<2x8x8xf32>, vector<2x8x8xf32>, vector<2x8x8xf32>, vector<2x8x8xf32> -> vector<8x8x8xf32>
    %204 = vector.extract_strided_slice %193 {offsets = [0, 0], sizes = [16, 8], strides = [1, 1]} : vector<16x32xf32> to vector<16x8xf32>
    %205 = vector.shape_cast %204 : vector<16x8xf32> to vector<2x8x8xf32>
    %206 = vector.extract_strided_slice %193 {offsets = [0, 8], sizes = [16, 8], strides = [1, 1]} : vector<16x32xf32> to vector<16x8xf32>
    %207 = vector.shape_cast %206 : vector<16x8xf32> to vector<2x8x8xf32>
    %208 = vector.extract_strided_slice %193 {offsets = [0, 16], sizes = [16, 8], strides = [1, 1]} : vector<16x32xf32> to vector<16x8xf32>
    %209 = vector.shape_cast %208 : vector<16x8xf32> to vector<2x8x8xf32>
    %210 = vector.extract_strided_slice %193 {offsets = [0, 24], sizes = [16, 8], strides = [1, 1]} : vector<16x32xf32> to vector<16x8xf32>
    %211 = vector.shape_cast %210 : vector<16x8xf32> to vector<2x8x8xf32>
    %212 = tpu.concatenate %205, %207, %209, %211 in 0 : vector<2x8x8xf32>, vector<2x8x8xf32>, vector<2x8x8xf32>, vector<2x8x8xf32> -> vector<8x8x8xf32>
    %213 = vector.extract_strided_slice %194 {offsets = [0, 0], sizes = [16, 8], strides = [1, 1]} : vector<16x32xf32> to vector<16x8xf32>
    %214 = vector.shape_cast %213 : vector<16x8xf32> to vector<2x8x8xf32>
    %215 = vector.extract_strided_slice %194 {offsets = [0, 8], sizes = [16, 8], strides = [1, 1]} : vector<16x32xf32> to vector<16x8xf32>
    %216 = vector.shape_cast %215 : vector<16x8xf32> to vector<2x8x8xf32>
    %217 = vector.extract_strided_slice %194 {offsets = [0, 16], sizes = [16, 8], strides = [1, 1]} : vector<16x32xf32> to vector<16x8xf32>
    %218 = vector.shape_cast %217 : vector<16x8xf32> to vector<2x8x8xf32>
    %219 = vector.extract_strided_slice %194 {offsets = [0, 24], sizes = [16, 8], strides = [1, 1]} : vector<16x32xf32> to vector<16x8xf32>
    %220 = vector.shape_cast %219 : vector<16x8xf32> to vector<2x8x8xf32>
    %221 = tpu.concatenate %214, %216, %218, %220 in 0 : vector<2x8x8xf32>, vector<2x8x8xf32>, vector<2x8x8xf32>, vector<2x8x8xf32> -> vector<8x8x8xf32>
    %222 = arith.truncf %203 : vector<8x8x8xf32> to vector<8x8x8xbf16>
    %223 = arith.truncf %212 : vector<8x8x8xf32> to vector<8x8x8xbf16>
    "tpu.trace_start"() <{level = 10 : i32, message = "nqd,nkd->nqk"}> : () -> ()
    %cst_77 = arith.constant dense<0.000000e+00> : vector<8x8x8xf32>
    %224 = tpu.matmul %222, %223, %cst_77 {dimension_numbers = #tpu.dot_dimension_numbers<[2], [2], [1], [1], [0, 0, 0, 1, 1, 1], [0], [0]>} : vector<8x8x8xbf16>, vector<8x8x8xbf16>, vector<8x8x8xf32> -> vector<8x8x8xf32>
    "tpu.trace_stop"() : () -> ()
    %cst_78 = arith.constant 0.353553385 : f32
    %225 = vector.broadcast %cst_78 : f32 to vector<8x8x8xf32>
    %226 = arith.mulf %224, %225 : vector<8x8x8xf32>
    %227 = vector.broadcast %25 : vector<8x1x8xf32> to vector<8x8x8xf32>
    %228 = arith.addf %226, %227 : vector<8x8x8xf32>
    %cst_79 = arith.constant dense<0xFF800000> : vector<8x8xf32>
    %229 = vector.multi_reduction <maximumf>, %228, %cst_79 [2] : vector<8x8x8xf32> to vector<8x8xf32>
    %230 = vector.shape_cast %229 : vector<8x8xf32> to vector<8x8x1xf32>
    %231 = vector.broadcast %230 : vector<8x8x1xf32> to vector<8x8x8xf32>
    %232 = arith.subf %228, %231 : vector<8x8x8xf32>
    %233 = math.exp %232 : vector<8x8x8xf32>
    %cst_80 = arith.constant dense<0.000000e+00> : vector<8x8xf32>
    %234 = vector.multi_reduction <add>, %233, %cst_80 [2] : vector<8x8x8xf32> to vector<8x8xf32>
    %235 = vector.shape_cast %234 : vector<8x8xf32> to vector<8x8x1xf32>
    %236 = tpu.reciprocal %235 {approx = true} : vector<8x8x1xf32> -> vector<8x8x1xf32>
    %237 = vector.broadcast %236 : vector<8x8x1xf32> to vector<8x8x8xf32>
    %238 = arith.mulf %233, %237 : vector<8x8x8xf32>
    %239 = arith.truncf %238 : vector<8x8x8xf32> to vector<8x8x8xbf16>
    %240 = arith.truncf %221 : vector<8x8x8xf32> to vector<8x8x8xbf16>
    "tpu.trace_start"() <{level = 10 : i32, message = "nqk,nkd->nqd"}> : () -> ()
    %cst_81 = arith.constant dense<0.000000e+00> : vector<8x8x8xf32>
    %241 = tpu.matmul %239, %240, %cst_81 {dimension_numbers = #tpu.dot_dimension_numbers<[2], [1], [1], [2], [0, 0, 0, 1, 1, 2], [0], [0]>} : vector<8x8x8xbf16>, vector<8x8x8xbf16>, vector<8x8x8xf32> -> vector<8x8x8xf32>
    "tpu.trace_stop"() : () -> ()
    %242 = vector.extract_strided_slice %241 {offsets = [0, 0, 0], sizes = [2, 8, 8], strides = [1, 1, 1]} : vector<8x8x8xf32> to vector<2x8x8xf32>
    %243 = vector.shape_cast %242 : vector<2x8x8xf32> to vector<16x8xf32>
    %244 = vector.extract_strided_slice %241 {offsets = [2, 0, 0], sizes = [2, 8, 8], strides = [1, 1, 1]} : vector<8x8x8xf32> to vector<2x8x8xf32>
    %245 = vector.shape_cast %244 : vector<2x8x8xf32> to vector<16x8xf32>
    %246 = vector.extract_strided_slice %241 {offsets = [4, 0, 0], sizes = [2, 8, 8], strides = [1, 1, 1]} : vector<8x8x8xf32> to vector<2x8x8xf32>
    %247 = vector.shape_cast %246 : vector<2x8x8xf32> to vector<16x8xf32>
    %248 = vector.extract_strided_slice %241 {offsets = [6, 0, 0], sizes = [2, 8, 8], strides = [1, 1, 1]} : vector<8x8x8xf32> to vector<2x8x8xf32>
    %249 = vector.shape_cast %248 : vector<2x8x8xf32> to vector<16x8xf32>
    %250 = tpu.concatenate %243, %245, %247, %249 in 1 : vector<16x8xf32>, vector<16x8xf32>, vector<16x8xf32>, vector<16x8xf32> -> vector<16x32xf32>
    %251 = arith.truncf %250 : vector<16x32xf32> to vector<16x32xbf16>
    %c1_82 = arith.constant 1 : index
    %c0_83 = arith.constant 0 : index
    %c0_84 = arith.constant 0 : index
    %252 = vector.load %arg7[%c1_82, %c0_83, %c0_84] : memref<2x32x32xbf16, #tpu.memory_space<vmem>>, vector<1x32x32xbf16>
    %253 = vector.shape_cast %252 : vector<1x32x32xbf16> to vector<32x32xbf16>
    %cst_85 = arith.constant dense<0.000000e+00> : vector<16x32xf32>
    %254 = tpu.matmul %251, %253, %cst_85 {dimension_numbers = #tpu.dot_dimension_numbers<[1], [0], [0], [1], [0, 0, 1, 1], [], []>} : vector<16x32xbf16>, vector<32x32xbf16>, vector<16x32xf32> -> vector<16x32xf32>
    %c1_86 = arith.constant 1 : index
    %c0_87 = arith.constant 0 : index
    %c0_88 = arith.constant 0 : index
    %255 = vector.load %arg8[%c1_86, %c0_87, %c0_88] : memref<2x1x32xf32, #tpu.memory_space<vmem>>, vector<1x1x32xf32>
    %256 = vector.shape_cast %255 : vector<1x1x32xf32> to vector<1x32xf32>
    %257 = vector.broadcast %256 : vector<1x32xf32> to vector<16x32xf32>
    %258 = arith.addf %254, %257 : vector<16x32xf32>
    %259 = arith.addf %183, %258 : vector<16x32xf32>
    %c1_89 = arith.constant 1 : index
    %c0_90 = arith.constant 0 : index
    %c0_91 = arith.constant 0 : index
    %260 = vector.load %arg9[%c1_89, %c0_90, %c0_91] : memref<2x1x32xf32, #tpu.memory_space<vmem>>, vector<1x1x32xf32>
    %261 = vector.shape_cast %260 : vector<1x1x32xf32> to vector<1x32xf32>
    %c1_92 = arith.constant 1 : index
    %c0_93 = arith.constant 0 : index
    %c0_94 = arith.constant 0 : index
    %262 = vector.load %arg10[%c1_92, %c0_93, %c0_94] : memref<2x1x32xf32, #tpu.memory_space<vmem>>, vector<1x1x32xf32>
    %263 = vector.shape_cast %262 : vector<1x1x32xf32> to vector<1x32xf32>
    %cst_95 = arith.constant dense<0.000000e+00> : vector<16xf32>
    %264 = vector.multi_reduction <add>, %259, %cst_95 [1] : vector<16x32xf32> to vector<16xf32>
    %265 = vector.shape_cast %264 : vector<16xf32> to vector<16x1xf32>
    %cst_96 = arith.constant 3.200000e+01 : f32
    %266 = vector.broadcast %cst_96 : f32 to vector<16x1xf32>
    %267 = arith.divf %265, %266 : vector<16x1xf32>
    %268 = vector.broadcast %267 : vector<16x1xf32> to vector<16x32xf32>
    %269 = arith.subf %259, %268 : vector<16x32xf32>
    %270 = arith.mulf %269, %269 : vector<16x32xf32>
    %cst_97 = arith.constant dense<0.000000e+00> : vector<16xf32>
    %271 = vector.multi_reduction <add>, %270, %cst_97 [1] : vector<16x32xf32> to vector<16xf32>
    %272 = vector.shape_cast %271 : vector<16xf32> to vector<16x1xf32>
    %cst_98 = arith.constant 3.200000e+01 : f32
    %273 = vector.broadcast %cst_98 : f32 to vector<16x1xf32>
    %274 = arith.divf %272, %273 : vector<16x1xf32>
    %275 = vector.broadcast %267 : vector<16x1xf32> to vector<16x32xf32>
    %276 = arith.subf %259, %275 : vector<16x32xf32>
    %cst_99 = arith.constant 9.99999996E-13 : f32
    %277 = vector.broadcast %cst_99 : f32 to vector<16x1xf32>
    %278 = arith.addf %274, %277 : vector<16x1xf32>
    %279 = math.rsqrt %278 : vector<16x1xf32>
    %280 = vector.broadcast %279 : vector<16x1xf32> to vector<16x32xf32>
    %281 = arith.mulf %276, %280 : vector<16x32xf32>
    %282 = vector.broadcast %261 : vector<1x32xf32> to vector<16x32xf32>
    %283 = arith.mulf %281, %282 : vector<16x32xf32>
    %284 = vector.broadcast %263 : vector<1x32xf32> to vector<16x32xf32>
    %285 = arith.addf %283, %284 : vector<16x32xf32>
    %286 = arith.truncf %285 : vector<16x32xf32> to vector<16x32xbf16>
    %c1_100 = arith.constant 1 : index
    %c0_101 = arith.constant 0 : index
    %c0_102 = arith.constant 0 : index
    %287 = vector.load %arg11[%c1_100, %c0_101, %c0_102] : memref<2x32x64xbf16, #tpu.memory_space<vmem>>, vector<1x32x64xbf16>
    %288 = vector.shape_cast %287 : vector<1x32x64xbf16> to vector<32x64xbf16>
    %cst_103 = arith.constant dense<0.000000e+00> : vector<16x64xf32>
    %289 = tpu.matmul %286, %288, %cst_103 {dimension_numbers = #tpu.dot_dimension_numbers<[1], [0], [0], [1], [0, 0, 1, 1], [], []>} : vector<16x32xbf16>, vector<32x64xbf16>, vector<16x64xf32> -> vector<16x64xf32>
    %c1_104 = arith.constant 1 : index
    %c0_105 = arith.constant 0 : index
    %c0_106 = arith.constant 0 : index
    %290 = vector.load %arg12[%c1_104, %c0_105, %c0_106] : memref<2x1x64xf32, #tpu.memory_space<vmem>>, vector<1x1x64xf32>
    %291 = vector.shape_cast %290 : vector<1x1x64xf32> to vector<1x64xf32>
    %292 = vector.broadcast %291 : vector<1x64xf32> to vector<16x64xf32>
    %293 = arith.addf %289, %292 : vector<16x64xf32>
    %cst_107 = arith.constant 5.000000e-01 : f32
    %294 = vector.broadcast %cst_107 : f32 to vector<16x64xf32>
    %295 = arith.mulf %294, %293 : vector<16x64xf32>
    %cst_108 = arith.constant 4.471500e-02 : f32
    %296 = vector.broadcast %cst_108 : f32 to vector<16x64xf32>
    %297 = arith.mulf %296, %293 : vector<16x64xf32>
    %298 = arith.mulf %297, %293 : vector<16x64xf32>
    %299 = arith.mulf %298, %293 : vector<16x64xf32>
    %300 = arith.addf %293, %299 : vector<16x64xf32>
    %cst_109 = arith.constant 0.797884583 : f32
    %301 = vector.broadcast %cst_109 : f32 to vector<16x64xf32>
    %302 = arith.mulf %301, %300 : vector<16x64xf32>
    %303 = math.tanh %302 : vector<16x64xf32>
    %cst_110 = arith.constant 1.000000e+00 : f32
    %304 = vector.broadcast %cst_110 : f32 to vector<16x64xf32>
    %305 = arith.addf %304, %303 : vector<16x64xf32>
    %306 = arith.mulf %295, %305 : vector<16x64xf32>
    %307 = arith.truncf %306 : vector<16x64xf32> to vector<16x64xbf16>
    %c1_111 = arith.constant 1 : index
    %c0_112 = arith.constant 0 : index
    %c0_113 = arith.constant 0 : index
    %308 = vector.load %arg13[%c1_111, %c0_112, %c0_113] : memref<2x64x32xbf16, #tpu.memory_space<vmem>>, vector<1x64x32xbf16>
    %309 = vector.shape_cast %308 : vector<1x64x32xbf16> to vector<64x32xbf16>
    %cst_114 = arith.constant dense<0.000000e+00> : vector<16x32xf32>
    %310 = tpu.matmul %307, %309, %cst_114 {dimension_numbers = #tpu.dot_dimension_numbers<[1], [0], [0], [1], [0, 0, 1, 1], [], []>} : vector<16x64xbf16>, vector<64x32xbf16>, vector<16x32xf32> -> vector<16x32xf32>
    %c1_115 = arith.constant 1 : index
    %c0_116 = arith.constant 0 : index
    %c0_117 = arith.constant 0 : index
    %311 = vector.load %arg14[%c1_115, %c0_116, %c0_117] : memref<2x1x32xf32, #tpu.memory_space<vmem>>, vector<1x1x32xf32>
    %312 = vector.shape_cast %311 : vector<1x1x32xf32> to vector<1x32xf32>
    %313 = vector.broadcast %312 : vector<1x32xf32> to vector<16x32xf32>
    %314 = arith.addf %310, %313 : vector<16x32xf32>
    %315 = arith.addf %285, %314 : vector<16x32xf32>
    %c1_118 = arith.constant 1 : index
    %c0_119 = arith.constant 0 : index
    %c0_120 = arith.constant 0 : index
    %316 = vector.load %arg15[%c1_118, %c0_119, %c0_120] : memref<2x1x32xf32, #tpu.memory_space<vmem>>, vector<1x1x32xf32>
    %317 = vector.shape_cast %316 : vector<1x1x32xf32> to vector<1x32xf32>
    %c1_121 = arith.constant 1 : index
    %c0_122 = arith.constant 0 : index
    %c0_123 = arith.constant 0 : index
    %318 = vector.load %arg16[%c1_121, %c0_122, %c0_123] : memref<2x1x32xf32, #tpu.memory_space<vmem>>, vector<1x1x32xf32>
    %319 = vector.shape_cast %318 : vector<1x1x32xf32> to vector<1x32xf32>
    %cst_124 = arith.constant dense<0.000000e+00> : vector<16xf32>
    %320 = vector.multi_reduction <add>, %315, %cst_124 [1] : vector<16x32xf32> to vector<16xf32>
    %321 = vector.shape_cast %320 : vector<16xf32> to vector<16x1xf32>
    %cst_125 = arith.constant 3.200000e+01 : f32
    %322 = vector.broadcast %cst_125 : f32 to vector<16x1xf32>
    %323 = arith.divf %321, %322 : vector<16x1xf32>
    %324 = vector.broadcast %323 : vector<16x1xf32> to vector<16x32xf32>
    %325 = arith.subf %315, %324 : vector<16x32xf32>
    %326 = arith.mulf %325, %325 : vector<16x32xf32>
    %cst_126 = arith.constant dense<0.000000e+00> : vector<16xf32>
    %327 = vector.multi_reduction <add>, %326, %cst_126 [1] : vector<16x32xf32> to vector<16xf32>
    %328 = vector.shape_cast %327 : vector<16xf32> to vector<16x1xf32>
    %cst_127 = arith.constant 3.200000e+01 : f32
    %329 = vector.broadcast %cst_127 : f32 to vector<16x1xf32>
    %330 = arith.divf %328, %329 : vector<16x1xf32>
    %331 = vector.broadcast %323 : vector<16x1xf32> to vector<16x32xf32>
    %332 = arith.subf %315, %331 : vector<16x32xf32>
    %cst_128 = arith.constant 9.99999996E-13 : f32
    %333 = vector.broadcast %cst_128 : f32 to vector<16x1xf32>
    %334 = arith.addf %330, %333 : vector<16x1xf32>
    %335 = math.rsqrt %334 : vector<16x1xf32>
    %336 = vector.broadcast %335 : vector<16x1xf32> to vector<16x32xf32>
    %337 = arith.mulf %332, %336 : vector<16x32xf32>
    %338 = vector.broadcast %317 : vector<1x32xf32> to vector<16x32xf32>
    %339 = arith.mulf %337, %338 : vector<16x32xf32>
    %340 = vector.broadcast %319 : vector<1x32xf32> to vector<16x32xf32>
    %341 = arith.addf %339, %340 : vector<16x32xf32>
    %342 = vector.shape_cast %341 : vector<16x32xf32> to vector<2x8x32xf32>
    %343 = vector.extract_strided_slice %342 {offsets = [0, 0, 0], sizes = [2, 1, 32], strides = [1, 1, 1]} : vector<2x8x32xf32> to vector<2x1x32xf32>
    %344 = vector.shape_cast %343 : vector<2x1x32xf32> to vector<2x32xf32>
    %345 = arith.truncf %344 : vector<2x32xf32> to vector<2x32xbf16>
    %c0_129 = arith.constant 0 : index
    %c0_130 = arith.constant 0 : index
    %346 = vector.load %arg17[%c0_129, %c0_130] : memref<32x32xbf16, #tpu.memory_space<vmem>>, vector<32x32xbf16>
    %cst_131 = arith.constant dense<0.000000e+00> : vector<2x32xf32>
    %347 = tpu.matmul %345, %346, %cst_131 {dimension_numbers = #tpu.dot_dimension_numbers<[1], [0], [0], [1], [0, 0, 1, 1], [], []>} : vector<2x32xbf16>, vector<32x32xbf16>, vector<2x32xf32> -> vector<2x32xf32>
    %c0_132 = arith.constant 0 : index
    %c0_133 = arith.constant 0 : index
    %348 = vector.load %arg18[%c0_132, %c0_133] : memref<1x32xf32, #tpu.memory_space<vmem>>, vector<1x32xf32>
    %349 = vector.broadcast %348 : vector<1x32xf32> to vector<2x32xf32>
    %350 = arith.addf %347, %349 : vector<2x32xf32>
    %351 = math.tanh %350 : vector<2x32xf32>
    %352 = arith.truncf %351 : vector<2x32xf32> to vector<2x32xbf16>
    %c0_134 = arith.constant 0 : index
    %c0_135 = arith.constant 0 : index
    %353 = vector.load %arg19[%c0_134, %c0_135] : memref<32x128xbf16, #tpu.memory_space<vmem>>, vector<32x128xbf16>
    %cst_136 = arith.constant dense<0.000000e+00> : vector<2x128xf32>
    %354 = tpu.matmul %352, %353, %cst_136 {dimension_numbers = #tpu.dot_dimension_numbers<[1], [0], [0], [1], [0, 0, 1, 1], [], []>} : vector<2x32xbf16>, vector<32x128xbf16>, vector<2x128xf32> -> vector<2x128xf32>
    %c0_137 = arith.constant 0 : index
    %c0_138 = arith.constant 0 : index
    %355 = vector.load %arg20[%c0_137, %c0_138] : memref<1x128xf32, #tpu.memory_space<vmem>>, vector<1x128xf32>
    %356 = vector.broadcast %355 : vector<1x128xf32> to vector<2x128xf32>
    %357 = arith.addf %354, %356 : vector<2x128xf32>
    %c0_139 = arith.constant 0 : index
    %c0_140 = arith.constant 0 : index
    %358 = vector.load %arg21[%c0_139, %c0_140] : memref<2x128xf32, #tpu.memory_space<vmem>>, vector<2x128xf32>
    tpu.vector_store %arg21[%c0_139, %c0_140], %357 {strides = array<i32>} : memref<2x128xf32, #tpu.memory_space<vmem>>, vector<2x128xf32>,
    %359 = tpu.iota {dimensions = array<i32: 1>} : vector<2x128xi32>
    %360 = tpu.iota {dimensions = array<i32: 0>} : vector<2x128xi32>
    %c5_i32 = arith.constant 5 : i32
    %361 = vector.broadcast %c5_i32 : i32 to vector<2x128xi32>
    %362 = arith.cmpi slt, %359, %361 : vector<2x128xi32>
    %cst_141 = arith.constant -1.000000e+09 : f32
    %363 = vector.broadcast %cst_141 : f32 to vector<2x128xf32>
    %364 = arith.select %362, %357, %363 : vector<2x128xi1>, vector<2x128xf32>
    %cst_142 = arith.constant dense<0xFF800000> : vector<2xf32>
    %365 = vector.multi_reduction <maximumf>, %364, %cst_142 [1] : vector<2x128xf32> to vector<2xf32>
    %366 = vector.shape_cast %365 : vector<2xf32> to vector<2x1xf32>
    %367 = vector.broadcast %366 : vector<2x1xf32> to vector<2x128xf32>
    %368 = arith.subf %364, %367 : vector<2x128xf32>
    %369 = math.exp %368 : vector<2x128xf32>
    %cst_143 = arith.constant dense<0.000000e+00> : vector<2xf32>
    %370 = vector.multi_reduction <add>, %369, %cst_143 [1] : vector<2x128xf32> to vector<2xf32>
    %371 = vector.shape_cast %370 : vector<2xf32> to vector<2x1xf32>
    %372 = math.log %371 : vector<2x1xf32>
    %373 = arith.addf %366, %372 : vector<2x1xf32>
    %cst_144 = arith.constant 0.000000e+00 : f32
    %374 = vector.broadcast %cst_144 : f32 to vector<2x128xf32>
    %c0_i32 = arith.constant 0 : i32
    %375 = vector.broadcast %c0_i32 : i32 to vector<2x128xi32>
    %376 = arith.cmpi eq, %360, %375 : vector<2x128xi32>
    %c0_145 = arith.constant 0 : index
    %377 = memref.load %arg0[%c0_145] : memref<2xi32, #tpu.memory_space<smem>>
    %378 = vector.broadcast %377 : i32 to vector<2x128xi32>
    %379 = arith.cmpi eq, %359, %378 : vector<2x128xi32>
    %380 = arith.andi %376, %379 : vector<2x128xi1>
    %cst_146 = arith.constant 1.000000e+00 : f32
    %381 = vector.broadcast %cst_146 : f32 to vector<2x128xf32>
    %382 = arith.select %380, %381, %374 : vector<2x128xi1>, vector<2x128xf32>
    %c1_i32 = arith.constant 1 : i32
    %383 = vector.broadcast %c1_i32 : i32 to vector<2x128xi32>
    %384 = arith.cmpi eq, %360, %383 : vector<2x128xi32>
    %c1_147 = arith.constant 1 : index
    %385 = memref.load %arg0[%c1_147] : memref<2xi32, #tpu.memory_space<smem>>
    %386 = vector.broadcast %385 : i32 to vector<2x128xi32>
    %387 = arith.cmpi eq, %359, %386 : vector<2x128xi32>
    %388 = arith.andi %384, %387 : vector<2x128xi1>
    %cst_148 = arith.constant 1.000000e+00 : f32
    %389 = vector.broadcast %cst_148 : f32 to vector<2x128xf32>
    %390 = arith.select %388, %389, %382 : vector<2x128xi1>, vector<2x128xf32>
    %391 = arith.mulf %390, %364 : vector<2x128xf32>
    %cst_149 = arith.constant dense<0.000000e+00> : vector<2xf32>
    %392 = vector.multi_reduction <add>, %391, %cst_149 [1] : vector<2x128xf32> to vector<2xf32>
    %393 = vector.shape_cast %392 : vector<2xf32> to vector<2x1xf32>
    %394 = arith.subf %373, %393 : vector<2x1xf32>
    %395 = vector.shape_cast %394 : vector<2x1xf32> to vector<1x2x1xf32>
    %cst_150 = arith.constant dense<0.000000e+00> : vector<1xf32>
    %396 = vector.multi_reduction <add>, %395, %cst_150 [1, 2] : vector<1x2x1xf32> to vector<1xf32>
    %397 = vector.shape_cast %396 : vector<1xf32> to vector<1x1x1xf32>
    %398 = vector.extract %397[0, 0, 0] : f32 from vector<1x1x1xf32>
    %cst_151 = arith.constant 5.000000e-01 : f32
    %399 = arith.mulf %398, %cst_151 : f32
    %c0_152 = arith.constant 0 : index
    %c0_153 = arith.constant 0 : index
    %400 = memref.load %arg22[%c0_152, %c0_153] : memref<1x1xf32, #tpu.memory_space<smem>>
    memref.store %399, %arg22[%c0_152, %c0_153] : memref<1x1xf32, #tpu.memory_space<smem>>
    return
  }
}

</mosaic_0001>

<llo_original>
// kernel: bert_forward.1
$region0: #{bert_forward.1}
  #allocation0 [shape = 'u32[]', space=smem, size = 0x4, offset = 0x4, fixed_abs, tag = 'smem constant byte address 0x4 - core index']
  #allocation1 [shape = 'u32[72,128]{1,0:T(1,128)}', space=vmem, size = 0x9000, scoped, tag = 'internal scratch']
  %s0 = inlined_call_operand.vmem [shape: s32[2], index: 0, kind: input, shape index: {}]
  %s1 = inlined_call_operand.vmem [shape: f32[16,32], index: 1, kind: input, shape index: {}]
  %s2 = inlined_call_operand.vmem [shape: f32[8,1,8], index: 2, kind: input, shape index: {}]
  %s3 = inlined_call_operand.vmem [shape: f32[1,32], index: 3, kind: input, shape index: {}]
  %s4 = inlined_call_operand.vmem [shape: f32[1,32], index: 4, kind: input, shape index: {}]
  %s5 = inlined_call_operand.vmem [shape: bf16[2,32,128], index: 5, kind: input, shape index: {}]
  %s6 = inlined_call_operand.vmem [shape: f32[2,1,128], index: 6, kind: input, shape index: {}]
  %s7 = inlined_call_operand.vmem [shape: bf16[2,32,32], index: 7, kind: input, shape index: {}]
  %s8 = inlined_call_operand.vmem [shape: f32[2,1,32], index: 8, kind: input, shape index: {}]
  %s9 = inlined_call_operand.vmem [shape: f32[2,1,32], index: 9, kind: input, shape index: {}]
  %s10 = inlined_call_operand.vmem [shape: f32[2,1,32], index: 10, kind: input, shape index: {}]
  %s11 = inlined_call_operand.vmem [shape: bf16[2,32,64], index: 11, kind: input, shape index: {}]
  %s12 = inlined_call_operand.vmem [shape: f32[2,1,64], index: 12, kind: input, shape index: {}]
  %s13 = inlined_call_operand.vmem [shape: bf16[2,64,32], index: 13, kind: input, shape index: {}]
  %s14 = inlined_call_operand.vmem [shape: f32[2,1,32], index: 14, kind: input, shape index: {}]
  %s15 = inlined_call_operand.vmem [shape: f32[2,1,32], index: 15, kind: input, shape index: {}]
  %s16 = inlined_call_operand.vmem [shape: f32[2,1,32], index: 16, kind: input, shape index: {}]
  %s17 = inlined_call_operand.vmem [shape: bf16[32,32], index: 17, kind: input, shape index: {}]
  %s18 = inlined_call_operand.vmem [shape: f32[1,32], index: 18, kind: input, shape index: {}]
  %s19 = inlined_call_operand.vmem [shape: bf16[32,128], index: 19, kind: input, shape index: {}]
  %s20 = inlined_call_operand.vmem [shape: f32[1,128], index: 20, kind: input, shape index: {}]
  %s21 = inlined_call_operand.vmem [shape: f32[2,128], index: 21, kind: output, shape index: {0}]
  %s22 = inlined_call_operand.hbm [shape: f32[1,1], index: 22, kind: output, shape index: {1}]
  %23 = xla_tuple %s21, %s22
  %s24 = sld [smem:[#allocation0]]
  $region106: #{bert_forward.1} parent=0
    _
  %s26 = ssub.s32 1, %s24
  %s27 = scalar_select 0, %s26, %s24
  $region1: #{bert_forward.1} parent=0
    #allocation2 [shape = 'u8[512]{0}', space=smem, size = 0x200, scoped, tag = 'input window, operand 0, single buffered']
    #allocation3 [shape = 's32[1]{0}', space=sflag, size = 0x4, scoped, tag = 'scoped memory for bert_forward.1']
    #allocation4 [shape = 's32[1]{0}', space=sflag, size = 0x4, scoped, tag = 'scoped memory for bert_forward.1']
    #allocation5 [shape = 'u8[512]{0}', space=smem, size = 0x200, scoped, tag = 'output window, operand 1, single buffered']
    %28 = vsyncpa [#allocation4], 0
    %29 = vsyncpa [#allocation3], 0
    // Predicated region
    $region2: #{bert_forward.1} parent=1 // pred_check
      _
    $region3: #{bert_forward.1} parent=1 // pred_check_branch
      %31 = sbr.rel (0) target = $region5
    $region4: #{bert_forward.1} parent=1 // pred_region
      %33 = vsyncadd [#allocation4], 0
      %s35 = sshll.u32 %s0, 4
      %s36 = int_to_ptr.vmem [resolvable:$true] %s35
      %38 = dma.vmem_to_smem %s36, 16, [#allocation2], [#allocation4]
    $region5: #{bert_forward.1} parent=1 // pred_fallthru
      _
    // Predicated region
    $region6: #{bert_forward.1} parent=1 // pred_check
      _
    $region7: #{bert_forward.1} parent=1 // pred_check_branch
      %40 = sbr.rel (0) target = $region9
    $region8: #{bert_forward.1} parent=1 // pred_region
      _
    $region9: #{bert_forward.1} parent=1 // pred_fallthru
      _
    // Predicated region
    $region10: #{bert_forward.1} parent=1 // pred_check
      _
    $region11: #{bert_forward.1} parent=1 // pred_check_branch
      %42 = sbr.rel (0) target = $region13
    $region12: #{bert_forward.1} parent=1 // pred_region
      _
    $region13: #{bert_forward.1} parent=1 // pred_fallthru
      _
    // Predicated region
    $region14: #{bert_forward.1} parent=1 // pred_check
      _
    $region15: #{bert_forward.1} parent=1 // pred_check_branch
      %44 = sbr.rel (0) target = $region17
    $region16: #{bert_forward.1} parent=1 // pred_region
      _
    $region17: #{bert_forward.1} parent=1 // pred_fallthru
      _
    // Predicated region
    $region18: #{bert_forward.1} parent=1 // pred_check
      _
    $region19: #{bert_forward.1} parent=1 // pred_check_branch
      %46 = sbr.rel (0) target = $region21
    $region20: #{bert_forward.1} parent=1 // pred_region
      _
    $region21: #{bert_forward.1} parent=1 // pred_fallthru
      _
    // Predicated region
    $region22: #{bert_forward.1} parent=1 // pred_check
      _
    $region23: #{bert_forward.1} parent=1 // pred_check_branch
      %48 = sbr.rel (0) target = $region25
    $region24: #{bert_forward.1} parent=1 // pred_region
      _
    $region25: #{bert_forward.1} parent=1 // pred_fallthru
      _
    // Predicated region
    $region26: #{bert_forward.1} parent=1 // pred_check
      _
    $region27: #{bert_forward.1} parent=1 // pred_check_branch
      %50 = sbr.rel (0) target = $region29
    $region28: #{bert_forward.1} parent=1 // pred_region
      _
    $region29: #{bert_forward.1} parent=1 // pred_fallthru
      _
    // Predicated region
    $region30: #{bert_forward.1} parent=1 // pred_check
      _
    $region31: #{bert_forward.1} parent=1 // pred_check_branch
      %52 = sbr.rel (0) target = $region33
    $region32: #{bert_forward.1} parent=1 // pred_region
      _
    $region33: #{bert_forward.1} parent=1 // pred_fallthru
      _
    // Predicated region
    $region34: #{bert_forward.1} parent=1 // pred_check
      _
    $region35: #{bert_forward.1} parent=1 // pred_check_branch
      %54 = sbr.rel (0) target = $region37
    $region36: #{bert_forward.1} parent=1 // pred_region
      _
    $region37: #{bert_forward.1} parent=1 // pred_fallthru
      _
    // Predicated region
    $region38: #{bert_forward.1} parent=1 // pred_check
      _
    $region39: #{bert_forward.1} parent=1 // pred_check_branch
      %56 = sbr.rel (0) target = $region41
    $region40: #{bert_forward.1} parent=1 // pred_region
      _
    $region41: #{bert_forward.1} parent=1 // pred_fallthru
      _
    // Predicated region
    $region42: #{bert_forward.1} parent=1 // pred_check
      _
    $region43: #{bert_forward.1} parent=1 // pred_check_branch
      %58 = sbr.rel (0) target = $region45
    $region44: #{bert_forward.1} parent=1 // pred_region
      _
    $region45: #{bert_forward.1} parent=1 // pred_fallthru
      _
    // Predicated region
    $region46: #{bert_forward.1} parent=1 // pred_check
      _
    $region47: #{bert_forward.1} parent=1 // pred_check_branch
      %60 = sbr.rel (0) target = $region49
    $region48: #{bert_forward.1} parent=1 // pred_region
      _
    $region49: #{bert_forward.1} parent=1 // pred_fallthru
      _
    // Predicated region
    $region50: #{bert_forward.1} parent=1 // pred_check
      _
    $region51: #{bert_forward.1} parent=1 // pred_check_branch
      %62 = sbr.rel (0) target = $region53
    $region52: #{bert_forward.1} parent=1 // pred_region
      _
    $region53: #{bert_forward.1} parent=1 // pred_fallthru
      _
    // Predicated region
    $region54: #{bert_forward.1} parent=1 // pred_check
      _
    $region55: #{bert_forward.1} parent=1 // pred_check_branch
      %64 = sbr.rel (0) target = $region57
    $region56: #{bert_forward.1} parent=1 // pred_region
      _
    $region57: #{bert_forward.1} parent=1 // pred_fallthru
      _
    // Predicated region
    $region58: #{bert_forward.1} parent=1 // pred_check
      _
    $region59: #{bert_forward.1} parent=1 // pred_check_branch
      %66 = sbr.rel (0) target = $region61
    $region60: #{bert_forward.1} parent=1 // pred_region
      _
    $region61: #{bert_forward.1} parent=1 // pred_fallthru
      _
    // Predicated region
    $region62: #{bert_forward.1} parent=1 // pred_check
      _
    $region63: #{bert_forward.1} parent=1 // pred_check_branch
      %68 = sbr.rel (0) target = $region65
    $region64: #{bert_forward.1} parent=1 // pred_region
      _
    $region65: #{bert_forward.1} parent=1 // pred_fallthru
      _
    // Predicated region
    $region66: #{bert_forward.1} parent=1 // pred_check
      _
    $region67: #{bert_forward.1} parent=1 // pred_check_branch
      %70 = sbr.rel (0) target = $region69
    $region68: #{bert_forward.1} parent=1 // pred_region
      _
    $region69: #{bert_forward.1} parent=1 // pred_fallthru
      _
    // Predicated region
    $region70: #{bert_forward.1} parent=1 // pred_check
      _
    $region71: #{bert_forward.1} parent=1 // pred_check_branch
      %72 = sbr.rel (0) target = $region73
    $region72: #{bert_forward.1} parent=1 // pred_region
      _
    $region73: #{bert_forward.1} parent=1 // pred_fallthru
      _
    // Predicated region
    $region74: #{bert_forward.1} parent=1 // pred_check
      _
    $region75: #{bert_forward.1} parent=1 // pred_check_branch
      %74 = sbr.rel (0) target = $region77
    $region76: #{bert_forward.1} parent=1 // pred_region
      _
    $region77: #{bert_forward.1} parent=1 // pred_fallthru
      _
    // Predicated region
    $region78: #{bert_forward.1} parent=1 // pred_check
      _
    $region79: #{bert_forward.1} parent=1 // pred_check_branch
      %76 = sbr.rel (0) target = $region81
    $region80: #{bert_forward.1} parent=1 // pred_region
      _
    $region81: #{bert_forward.1} parent=1 // pred_fallthru
      _
    // Predicated region
    $region82: #{bert_forward.1} parent=1 // pred_check
      _
    $region83: #{bert_forward.1} parent=1 // pred_check_branch
      %78 = sbr.rel (0) target = $region85
    $region84: #{bert_forward.1} parent=1 // pred_region
      _
    $region85: #{bert_forward.1} parent=1 // pred_fallthru
      _
    // Predicated region
    $region86: #{bert_forward.1} parent=1 // pred_check
      _
    $region87: #{bert_forward.1} parent=1 // pred_check_branch
      %80 = sbr.rel (0) target = $region89
    $region88: #{bert_forward.1} parent=1 // pred_region
      %82 = dma.done [#allocation4], 16
    $region89: #{bert_forward.1} parent=1 // pred_fallthru
      _
    %83 = sfence
    %v85 = vld [vmem:[%s1] sm:$0xff]
    %v86 = vld [vmem:[%s1 + $0x8] sm:$0xff]
    %v87 = vld [vmem:[%s3] sm:$0x1]
    %v88 = vld [vmem:[%s4] sm:$0x1]
    %vm89 = vcmask 261120
    %v90 = vsel %vm89, %v85, 0.0
    %91 = vadd.xlane.f32.xlu0 %v90
    %v92 = vpop.xlane.xlu0 %91
    %v93 = vsel %vm89, %v86, 0.0
    %94 = vadd.xlane.f32.xlu0 %v93
    %v95 = vpop.xlane.xlu0 %94
    %v96 = vrcp.pop 32.0
    %v97 = vmul.f32 32.0, %v96
    %v98 = vsub.f32 1.0, %v97
    %v99 = vmul.f32 %v96, %v98
    %v100 = vadd.f32 %v96, %v99
    %vm101 = vweird.f32 %v96
    %v102 = vsel %vm101, %v96, %v100
    %v103 = vmul.f32 %v92, %v102
    %v104 = vmul.f32 %v95, %v102
    %v105 = vsub.f32 %v85, %v103
    %v106 = vsub.f32 %v86, %v104
    %v107 = vmul.f32 %v105, %v105
    %v108 = vmul.f32 %v106, %v106
    %v109 = vsel %vm89, %v107, 0.0
    %110 = vadd.xlane.f32.xlu0 %v109
    %v111 = vpop.xlane.xlu0 %110
    %v112 = vsel %vm89, %v108, 0.0
    %113 = vadd.xlane.f32.xlu0 %v112
    %v114 = vpop.xlane.xlu0 %113
    %v115 = vmul.f32 %v111, %v102
    %v116 = vmul.f32 %v114, %v102
    %v117 = vadd.f32 %v115, 1e-12
    %v118 = vadd.f32 %v116, 1e-12
    %v119 = vrsqrt.pop %v117
    %v120 = vmul.f32 %v119, %v117
    %v121 = vmul.f32 %v120, %v119
    %v122 = vmul.f32 0.5, %v121
    %v123 = vsub.f32 1.5, %v122
    %v124 = vmul.f32 %v119, %v123
    %vm125 = vweird.f32 %v117
    %vm126 = vweird.f32 %v119
    %vm127 = vmor %vm125, %vm126
    %v128 = vsel %vm127, %v119, %v124
    %v129 = vrsqrt.pop %v118
    %v130 = vmul.f32 %v129, %v118
    %v131 = vmul.f32 %v130, %v129
    %v132 = vmul.f32 0.5, %v131
    %v133 = vsub.f32 1.5, %v132
    %v134 = vmul.f32 %v129, %v133
    %vm135 = vweird.f32 %v118
    %vm136 = vweird.f32 %v129
    %vm137 = vmor %vm135, %vm136
    %v138 = vsel %vm137, %v129, %v134
    %v139 = vmul.f32 %v105, %v128
    %v140 = vmul.f32 %v106, %v138
    %v142 = vperm.slane %v87, 0
    %v144 = vmul.f32 %v139, %v142
    %v145 = vmul.f32 %v140, %v142
    %v147 = vperm.slane %v88, 0
    %v149 = vadd.f32 %v144, %v147
    %v150 = vadd.f32 %v145, %v147
    %v151 = vld [vmem:[%s2] sm:$0x1]
    %v152 = vld [vmem:[%s2 + $0x1] sm:$0x1]
    %v153 = vld [vmem:[%s2 + $0x2] sm:$0x1]
    %v154 = vld [vmem:[%s2 + $0x3] sm:$0x1]
    %v155 = vld [vmem:[%s2 + $0x4] sm:$0x1]
    %v156 = vld [vmem:[%s2 + $0x5] sm:$0x1]
    %v157 = vld [vmem:[%s2 + $0x6] sm:$0x1]
    %v158 = vld [vmem:[%s2 + $0x7] sm:$0x1]
    %v159 = vpack.c.bf16 %v150, %v149
    %v160 = vld [vmem:[%s5] sm:$0xf]
    %v161 = vld [vmem:[%s5 + $0x4] sm:$0xf]
    %v162 = vld [vmem:[%s5 + $0x8] sm:$0xf]
    %v163 = vld [vmem:[%s5 + $0xc] sm:$0xf]
    %v164 = vld [vmem:[%s6] sm:$0x1]
    %v166 = vperm.slane %v164, 0
    %v172 = vunpack.c.l.b16 %v160
    %v173 = vunpack.c.l.b16 %v161
    %v174 = vunpack.c.l.b16 %v162
    %v175 = vunpack.c.l.b16 %v163
    %v176 = vpack.c.b16 %v173, %v172
    %v177 = vpack.c.b16 %v175, %v174
    %v181 = vsel %vm89, %v159, 0
    %183 = vmatpush.bf16.msra.mxu0 0
    %184 = vmatpush.bf16.msra.mxu0 0
    %185 = vmatpush.bf16.msra.mxu0 0
    %186 = vmatpush.bf16.msra.mxu0 0
    %187 = vmatpush.bf16.msra.mxu0 0
    %188 = vmatpush.bf16.msra.mxu0 0
    %189 = vmatpush.bf16.msra.mxu0 %v177
    %190 = vmatpush.bf16.msra.mxu0 %v176
    %191 = vmatmul.bf16.gmra.mxu0 %v181
    %v192 = vpop.f32.mrf.mxu0
    %v193 = vadd.f32 %v166, %v192
    %v194 = vpop.f32.mrf.mxu0
    %v195 = vadd.f32 %v166, %v194
    %196 = vdwg.mxu0
    %199 = vrot.lane.b32.xlu0 %v193, 120
    %v200 = vpop.permute.xlu0 %199
    %201 = vrot.lane.b32.xlu0 %v195, 120
    %v202 = vpop.permute.xlu0 %201
    %205 = vrot.lane.b32.xlu0 %v193, 112
    %v206 = vpop.permute.xlu0 %205
    %207 = vrot.lane.b32.xlu0 %v195, 112
    %v208 = vpop.permute.xlu0 %207
    %211 = vrot.lane.b32.xlu0 %v193, 104
    %v212 = vpop.permute.xlu0 %211
    %213 = vrot.lane.b32.xlu0 %v195, 104
    %v214 = vpop.permute.xlu0 %213
    %v217 = vpack.c.bf16 %v193, %v193
    %v218 = vpack.c.bf16 %v195, %v195
    %v219 = vpack.c.bf16 %v200, %v200
    %v220 = vpack.c.bf16 %v202, %v202
    %v221 = vpack.c.bf16 %v206, %v206
    %v222 = vpack.c.bf16 %v208, %v208
    %v223 = vpack.c.bf16 %v212, %v212
    %v224 = vpack.c.bf16 %v214, %v214
    %v226 = vunpack.c.l.b16 %v217
    %v227 = vpack.c.b16 %v226, %v226
    %228 = vrot.lane.b32.xlu0 %v227, 96
    %v229 = vpop.permute.xlu0 %228
    %vm230 = vcmask 64512
    %v232 = vsel %vm230, %v217, 0
    %v235 = vsel %vm230, %v229, 0
    %237 = vmatpush.bf16.xpose.msra.mxu0 0
    %238 = vmatpush.bf16.xpose.msra.mxu0 0
    %239 = vmatpush.bf16.xpose.msra.mxu0 0
    %240 = vmatpush.bf16.xpose.msra.mxu0 0
    %241 = vmatpush.bf16.xpose.msra.mxu0 0
    %242 = vmatpush.bf16.xpose.msra.mxu0 0
    %243 = vmatpush.bf16.xpose.msra.mxu0 0
    %244 = vmatpush.bf16.xpose.msra.mxu0 %v235
    %245 = vmatmul.bf16.gmra.mxu0 %v232
    %v246 = vpop.f32.mrf.mxu0
    %v247 = vadd.f32 0.0, %v246
    %v248 = vpop.f32.mrf.mxu0
    %249 = vdwg.mxu0
    %v251 = vunpack.c.l.b16 %v218
    %v252 = vpack.c.b16 %v251, %v251
    %253 = vrot.lane.b32.xlu0 %v252, 96
    %v254 = vpop.permute.xlu0 %253
    %v256 = vsel %vm230, %v218, 0
    %v259 = vsel %vm230, %v254, 0
    %261 = vmatpush.bf16.xpose.msra.mxu0 0
    %262 = vmatpush.bf16.xpose.msra.mxu0 0
    %263 = vmatpush.bf16.xpose.msra.mxu0 0
    %264 = vmatpush.bf16.xpose.msra.mxu0 0
    %265 = vmatpush.bf16.xpose.msra.mxu0 0
    %266 = vmatpush.bf16.xpose.msra.mxu0 0
    %267 = vmatpush.bf16.xpose.msra.mxu0 0
    %268 = vmatpush.bf16.xpose.msra.mxu0 %v259
    %269 = vmatmul.bf16.gmra.mxu0 %v256
    %v270 = vpop.f32.mrf.mxu0
    %v271 = vadd.f32 0.0, %v270
    %v272 = vpop.f32.mrf.mxu0
    %273 = vdwg.mxu0
    %v275 = vunpack.c.l.b16 %v219
    %v276 = vpack.c.b16 %v275, %v275
    %277 = vrot.lane.b32.xlu0 %v276, 96
    %v278 = vpop.permute.xlu0 %277
    %v280 = vsel %vm230, %v219, 0
    %v283 = vsel %vm230, %v278, 0
    %285 = vmatpush.bf16.xpose.msra.mxu0 0
    %286 = vmatpush.bf16.xpose.msra.mxu0 0
    %287 = vmatpush.bf16.xpose.msra.mxu0 0
    %288 = vmatpush.bf16.xpose.msra.mxu0 0
    %289 = vmatpush.bf16.xpose.msra.mxu0 0
    %290 = vmatpush.bf16.xpose.msra.mxu0 0
    %291 = vmatpush.bf16.xpose.msra.mxu0 0
    %292 = vmatpush.bf16.xpose.msra.mxu0 %v283
    %293 = vmatmul.bf16.gmra.mxu0 %v280
    %v294 = vpop.f32.mrf.mxu0
    %v295 = vadd.f32 0.0, %v294
    %v296 = vpop.f32.mrf.mxu0
    %297 = vdwg.mxu0
    %v299 = vunpack.c.l.b16 %v220
    %v300 = vpack.c.b16 %v299, %v299
    %301 = vrot.lane.b32.xlu0 %v300, 96
    %v302 = vpop.permute.xlu0 %301
    %v304 = vsel %vm230, %v220, 0
    %v307 = vsel %vm230, %v302, 0
    %309 = vmatpush.bf16.xpose.msra.mxu0 0
    %310 = vmatpush.bf16.xpose.msra.mxu0 0
    %311 = vmatpush.bf16.xpose.msra.mxu0 0
    %312 = vmatpush.bf16.xpose.msra.mxu0 0
    %313 = vmatpush.bf16.xpose.msra.mxu0 0
    %314 = vmatpush.bf16.xpose.msra.mxu0 0
    %315 = vmatpush.bf16.xpose.msra.mxu0 0
    %316 = vmatpush.bf16.xpose.msra.mxu0 %v307
    %317 = vmatmul.bf16.gmra.mxu0 %v304
    %v318 = vpop.f32.mrf.mxu0
    %v319 = vadd.f32 0.0, %v318
    %v320 = vpop.f32.mrf.mxu0
    %321 = vdwg.mxu0
    %v323 = vunpack.c.l.b16 %v221
    %v324 = vpack.c.b16 %v323, %v323
    %325 = vrot.lane.b32.xlu0 %v324, 96
    %v326 = vpop.permute.xlu0 %325
    %v328 = vsel %vm230, %v221, 0
    %v331 = vsel %vm230, %v326, 0
    %333 = vmatpush.bf16.xpose.msra.mxu0 0
    %334 = vmatpush.bf16.xpose.msra.mxu0 0
    %335 = vmatpush.bf16.xpose.msra.mxu0 0
    %336 = vmatpush.bf16.xpose.msra.mxu0 0
    %337 = vmatpush.bf16.xpose.msra.mxu0 0
    %338 = vmatpush.bf16.xpose.msra.mxu0 0
    %339 = vmatpush.bf16.xpose.msra.mxu0 0
    %340 = vmatpush.bf16.xpose.msra.mxu0 %v331
    %341 = vmatmul.bf16.gmra.mxu0 %v328
    %v342 = vpop.f32.mrf.mxu0
    %v343 = vadd.f32 0.0, %v342
    %v344 = vpop.f32.mrf.mxu0
    %345 = vdwg.mxu0
    %v347 = vunpack.c.l.b16 %v222
    %v348 = vpack.c.b16 %v347, %v347
    %349 = vrot.lane.b32.xlu0 %v348, 96
    %v350 = vpop.permute.xlu0 %349
    %v352 = vsel %vm230, %v222, 0
    %v355 = vsel %vm230, %v350, 0
    %357 = vmatpush.bf16.xpose.msra.mxu0 0
    %358 = vmatpush.bf16.xpose.msra.mxu0 0
    %359 = vmatpush.bf16.xpose.msra.mxu0 0
    %360 = vmatpush.bf16.xpose.msra.mxu0 0
    %361 = vmatpush.bf16.xpose.msra.mxu0 0
    %362 = vmatpush.bf16.xpose.msra.mxu0 0
    %363 = vmatpush.bf16.xpose.msra.mxu0 0
    %364 = vmatpush.bf16.xpose.msra.mxu0 %v355
    %365 = vmatmul.bf16.gmra.mxu0 %v352
    %v366 = vpop.f32.mrf.mxu0
    %v367 = vadd.f32 0.0, %v366
    %v368 = vpop.f32.mrf.mxu0
    %369 = vdwg.mxu0
    %v371 = vunpack.c.l.b16 %v223
    %v372 = vpack.c.b16 %v371, %v371
    %373 = vrot.lane.b32.xlu0 %v372, 96
    %v374 = vpop.permute.xlu0 %373
    %v376 = vsel %vm230, %v223, 0
    %v379 = vsel %vm230, %v374, 0
    %381 = vmatpush.bf16.xpose.msra.mxu0 0
    %382 = vmatpush.bf16.xpose.msra.mxu0 0
    %383 = vmatpush.bf16.xpose.msra.mxu0 0
    %384 = vmatpush.bf16.xpose.msra.mxu0 0
    %385 = vmatpush.bf16.xpose.msra.mxu0 0
    %386 = vmatpush.bf16.xpose.msra.mxu0 0
    %387 = vmatpush.bf16.xpose.msra.mxu0 0
    %388 = vmatpush.bf16.xpose.msra.mxu0 %v379
    %389 = vmatmul.bf16.gmra.mxu0 %v376
    %v390 = vpop.f32.mrf.mxu0
    %v391 = vadd.f32 0.0, %v390
    %v392 = vpop.f32.mrf.mxu0
    %393 = vdwg.mxu0
    %v395 = vunpack.c.l.b16 %v224
    %v396 = vpack.c.b16 %v395, %v395
    %397 = vrot.lane.b32.xlu0 %v396, 96
    %v398 = vpop.permute.xlu0 %397
    %v400 = vsel %vm230, %v224, 0
    %v403 = vsel %vm230, %v398, 0
    %405 = vmatpush.bf16.xpose.msra.mxu0 0
    %406 = vmatpush.bf16.xpose.msra.mxu0 0
    %407 = vmatpush.bf16.xpose.msra.mxu0 0
    %408 = vmatpush.bf16.xpose.msra.mxu0 0
    %409 = vmatpush.bf16.xpose.msra.mxu0 0
    %410 = vmatpush.bf16.xpose.msra.mxu0 0
    %411 = vmatpush.bf16.xpose.msra.mxu0 0
    %412 = vmatpush.bf16.xpose.msra.mxu0 %v403
    %413 = vmatmul.bf16.gmra.mxu0 %v400
    %v414 = vpop.f32.mrf.mxu0
    %v415 = vadd.f32 0.0, %v414
    %v416 = vpop.f32.mrf.mxu0
    %417 = vdwg.mxu0
    %v418 = vmul.f32 %v247, 0.35355338
    %v419 = vmul.f32 %v271, 0.35355338
    %v420 = vmul.f32 %v295, 0.35355338
    %v421 = vmul.f32 %v319, 0.35355338
    %v422 = vmul.f32 %v343, 0.35355338
    %v423 = vmul.f32 %v367, 0.35355338
    %v424 = vmul.f32 %v391, 0.35355338
    %v425 = vmul.f32 %v415, 0.35355338
    %v434 = vperm.slane %v151, 0
    %v435 = vperm.slane %v152, 0
    %v436 = vperm.slane %v153, 0
    %v437 = vperm.slane %v154, 0
    %v438 = vperm.slane %v155, 0
    %v439 = vperm.slane %v156, 0
    %v440 = vperm.slane %v157, 0
    %v441 = vperm.slane %v158, 0
    %v450 = vadd.f32 %v418, %v434
    %v451 = vadd.f32 %v419, %v435
    %v452 = vadd.f32 %v420, %v436
    %v453 = vadd.f32 %v421, %v437
    %v454 = vadd.f32 %v422, %v438
    %v455 = vadd.f32 %v423, %v439
    %v456 = vadd.f32 %v424, %v440
    %v457 = vadd.f32 %v425, %v441
    %v458 = vsel %vm230, %v450, -inf
    %459 = vmax.xlane.f32.xlu0 %v458
    %v460 = vpop.xlane.xlu0 %459
    %v461 = vsel %vm230, %v451, -inf
    %462 = vmax.xlane.f32.xlu0 %v461
    %v463 = vpop.xlane.xlu0 %462
    %v464 = vsel %vm230, %v452, -inf
    %465 = vmax.xlane.f32.xlu0 %v464
    %v466 = vpop.xlane.xlu0 %465
    %v467 = vsel %vm230, %v453, -inf
    %468 = vmax.xlane.f32.xlu0 %v467
    %v469 = vpop.xlane.xlu0 %468
    %v470 = vsel %vm230, %v454, -inf
    %471 = vmax.xlane.f32.xlu0 %v470
    %v472 = vpop.xlane.xlu0 %471
    %v473 = vsel %vm230, %v455, -inf
    %474 = vmax.xlane.f32.xlu0 %v473
    %v475 = vpop.xlane.xlu0 %474
    %v476 = vsel %vm230, %v456, -inf
    %477 = vmax.xlane.f32.xlu0 %v476
    %v478 = vpop.xlane.xlu0 %477
    %v479 = vsel %vm230, %v457, -inf
    %480 = vmax.xlane.f32.xlu0 %v479
    %v481 = vpop.xlane.xlu0 %480
    %v482 = vsub.f32 %v450, %v460
    %v483 = vsub.f32 %v451, %v463
    %v484 = vsub.f32 %v452, %v466
    %v485 = vsub.f32 %v453, %v469
    %v486 = vsub.f32 %v454, %v472
    %v487 = vsub.f32 %v455, %v475
    %v488 = vsub.f32 %v456, %v478
    %v489 = vsub.f32 %v457, %v481
    %v490 = vmul.f32 %v482, 1.442695
    %v491 = vpow.pop %v490
    %v492 = vmul.f32 %v483, 1.442695
    %v493 = vpow.pop %v492
    %v494 = vmul.f32 %v484, 1.442695
    %v495 = vpow.pop %v494
    %v496 = vmul.f32 %v485, 1.442695
    %v497 = vpow.pop %v496
    %v498 = vmul.f32 %v486, 1.442695
    %v499 = vpow.pop %v498
    %v500 = vmul.f32 %v487, 1.442695
    %v501 = vpow.pop %v500
    %v502 = vmul.f32 %v488, 1.442695
    %v503 = vpow.pop %v502
    %v504 = vmul.f32 %v489, 1.442695
    %v505 = vpow.pop %v504
    %v506 = vsel %vm230, %v491, 0.0
    %507 = vadd.xlane.f32.xlu0 %v506
    %v508 = vpop.xlane.xlu0 %507
    %v509 = vsel %vm230, %v493, 0.0
    %510 = vadd.xlane.f32.xlu0 %v509
    %v511 = vpop.xlane.xlu0 %510
    %v512 = vsel %vm230, %v495, 0.0
    %513 = vadd.xlane.f32.xlu0 %v512
    %v514 = vpop.xlane.xlu0 %513
    %v515 = vsel %vm230, %v497, 0.0
    %516 = vadd.xlane.f32.xlu0 %v515
    %v517 = vpop.xlane.xlu0 %516
    %v518 = vsel %vm230, %v499, 0.0
    %519 = vadd.xlane.f32.xlu0 %v518
    %v520 = vpop.xlane.xlu0 %519
    %v521 = vsel %vm230, %v501, 0.0
    %522 = vadd.xlane.f32.xlu0 %v521
    %v523 = vpop.xlane.xlu0 %522
    %v524 = vsel %vm230, %v503, 0.0
    %525 = vadd.xlane.f32.xlu0 %v524
    %v526 = vpop.xlane.xlu0 %525
    %v527 = vsel %vm230, %v505, 0.0
    %528 = vadd.xlane.f32.xlu0 %v527
    %v529 = vpop.xlane.xlu0 %528
    %v530 = vrcp.pop %v508
    %v531 = vrcp.pop %v511
    %v532 = vrcp.pop %v514
    %v533 = vrcp.pop %v517
    %v534 = vrcp.pop %v520
    %v535 = vrcp.pop %v523
    %v536 = vrcp.pop %v526
    %v537 = vrcp.pop %v529
    %v538 = vmul.f32 %v491, %v530
    %v539 = vmul.f32 %v493, %v531
    %v540 = vmul.f32 %v495, %v532
    %v541 = vmul.f32 %v497, %v533
    %v542 = vmul.f32 %v499, %v534
    %v543 = vmul.f32 %v501, %v535
    %v544 = vmul.f32 %v503, %v536
    %v545 = vmul.f32 %v505, %v537
    %v546 = vpack.c.bf16 %v538, %v538
    %v547 = vpack.c.bf16 %v539, %v539
    %v548 = vpack.c.bf16 %v540, %v540
    %v549 = vpack.c.bf16 %v541, %v541
    %v550 = vpack.c.bf16 %v542, %v542
    %v551 = vpack.c.bf16 %v543, %v543
    %v552 = vpack.c.bf16 %v544, %v544
    %v553 = vpack.c.bf16 %v545, %v545
    %554 = vrot.lane.b32.xlu0 %v227, 64
    %v555 = vpop.permute.xlu0 %554
    %v557 = vsel %vm230, %v546, 0
    %vm559 = vcmask 1043456
    %v561 = vsel %vm559, %v555, 0
    %563 = vmatpush.bf16.msra.mxu0 0
    %564 = vmatpush.bf16.msra.mxu0 0
    %565 = vmatpush.bf16.msra.mxu0 0
    %566 = vmatpush.bf16.msra.mxu0 0
    %567 = vmatpush.bf16.msra.mxu0 0
    %568 = vmatpush.bf16.msra.mxu0 0
    %569 = vmatpush.bf16.msra.mxu0 0
    %570 = vmatpush.bf16.msra.mxu0 %v561
    %571 = vmatmul.bf16.gmra.mxu0 %v557
    %v572 = vpop.f32.mrf.mxu0
    %v573 = vadd.f32 0.0, %v572
    %v574 = vpop.f32.mrf.mxu0
    %575 = vdwg.mxu0
    %576 = vrot.lane.b32.xlu0 %v252, 64
    %v577 = vpop.permute.xlu0 %576
    %v579 = vsel %vm230, %v547, 0
    %v582 = vsel %vm559, %v577, 0
    %584 = vmatpush.bf16.msra.mxu0 0
    %585 = vmatpush.bf16.msra.mxu0 0
    %586 = vmatpush.bf16.msra.mxu0 0
    %587 = vmatpush.bf16.msra.mxu0 0
    %588 = vmatpush.bf16.msra.mxu0 0
    %589 = vmatpush.bf16.msra.mxu0 0
    %590 = vmatpush.bf16.msra.mxu0 0
    %591 = vmatpush.bf16.msra.mxu0 %v582
    %592 = vmatmul.bf16.gmra.mxu0 %v579
    %v593 = vpop.f32.mrf.mxu0
    %v594 = vadd.f32 0.0, %v593
    %v595 = vpop.f32.mrf.mxu0
    %596 = vdwg.mxu0
    %597 = vrot.lane.b32.xlu0 %v276, 64
    %v598 = vpop.permute.xlu0 %597
    %v600 = vsel %vm230, %v548, 0
    %v603 = vsel %vm559, %v598, 0
    %605 = vmatpush.bf16.msra.mxu0 0
    %606 = vmatpush.bf16.msra.mxu0 0
    %607 = vmatpush.bf16.msra.mxu0 0
    %608 = vmatpush.bf16.msra.mxu0 0
    %609 = vmatpush.bf16.msra.mxu0 0
    %610 = vmatpush.bf16.msra.mxu0 0
    %611 = vmatpush.bf16.msra.mxu0 0
    %612 = vmatpush.bf16.msra.mxu0 %v603
    %613 = vmatmul.bf16.gmra.mxu0 %v600
    %v614 = vpop.f32.mrf.mxu0
    %v615 = vadd.f32 0.0, %v614
    %v616 = vpop.f32.mrf.mxu0
    %617 = vdwg.mxu0
    %618 = vrot.lane.b32.xlu0 %v300, 64
    %v619 = vpop.permute.xlu0 %618
    %v621 = vsel %vm230, %v549, 0
    %v624 = vsel %vm559, %v619, 0
    %626 = vmatpush.bf16.msra.mxu0 0
    %627 = vmatpush.bf16.msra.mxu0 0
    %628 = vmatpush.bf16.msra.mxu0 0
    %629 = vmatpush.bf16.msra.mxu0 0
    %630 = vmatpush.bf16.msra.mxu0 0
    %631 = vmatpush.bf16.msra.mxu0 0
    %632 = vmatpush.bf16.msra.mxu0 0
    %633 = vmatpush.bf16.msra.mxu0 %v624
    %634 = vmatmul.bf16.gmra.mxu0 %v621
    %v635 = vpop.f32.mrf.mxu0
    %v636 = vadd.f32 0.0, %v635
    %v637 = vpop.f32.mrf.mxu0
    %638 = vdwg.mxu0
    %639 = vrot.lane.b32.xlu0 %v324, 64
    %v640 = vpop.permute.xlu0 %639
    %v642 = vsel %vm230, %v550, 0
    %v645 = vsel %vm559, %v640, 0
    %647 = vmatpush.bf16.msra.mxu0 0
    %648 = vmatpush.bf16.msra.mxu0 0
    %649 = vmatpush.bf16.msra.mxu0 0
    %650 = vmatpush.bf16.msra.mxu0 0
    %651 = vmatpush.bf16.msra.mxu0 0
    %652 = vmatpush.bf16.msra.mxu0 0
    %653 = vmatpush.bf16.msra.mxu0 0
    %654 = vmatpush.bf16.msra.mxu0 %v645
    %655 = vmatmul.bf16.gmra.mxu0 %v642
    %v656 = vpop.f32.mrf.mxu0
    %v657 = vadd.f32 0.0, %v656
    %v658 = vpop.f32.mrf.mxu0
    %659 = vdwg.mxu0
    %660 = vrot.lane.b32.xlu0 %v348, 64
    %v661 = vpop.permute.xlu0 %660
    %v663 = vsel %vm230, %v551, 0
    %v666 = vsel %vm559, %v661, 0
    %668 = vmatpush.bf16.msra.mxu0 0
    %669 = vmatpush.bf16.msra.mxu0 0
    %670 = vmatpush.bf16.msra.mxu0 0
    %671 = vmatpush.bf16.msra.mxu0 0
    %672 = vmatpush.bf16.msra.mxu0 0
    %673 = vmatpush.bf16.msra.mxu0 0
    %674 = vmatpush.bf16.msra.mxu0 0
    %675 = vmatpush.bf16.msra.mxu0 %v666
    %676 = vmatmul.bf16.gmra.mxu0 %v663
    %v677 = vpop.f32.mrf.mxu0
    %v678 = vadd.f32 0.0, %v677
    %v679 = vpop.f32.mrf.mxu0
    %680 = vdwg.mxu0
    %681 = vrot.lane.b32.xlu0 %v372, 64
    %v682 = vpop.permute.xlu0 %681
    %v684 = vsel %vm230, %v552, 0
    %v687 = vsel %vm559, %v682, 0
    %689 = vmatpush.bf16.msra.mxu0 0
    %690 = vmatpush.bf16.msra.mxu0 0
    %691 = vmatpush.bf16.msra.mxu0 0
    %692 = vmatpush.bf16.msra.mxu0 0
    %693 = vmatpush.bf16.msra.mxu0 0
    %694 = vmatpush.bf16.msra.mxu0 0
    %695 = vmatpush.bf16.msra.mxu0 0
    %696 = vmatpush.bf16.msra.mxu0 %v687
    %697 = vmatmul.bf16.gmra.mxu0 %v684
    %v698 = vpop.f32.mrf.mxu0
    %v699 = vadd.f32 0.0, %v698
    %v700 = vpop.f32.mrf.mxu0
    %701 = vdwg.mxu0
    %702 = vrot.lane.b32.xlu0 %v396, 64
    %v703 = vpop.permute.xlu0 %702
    %v705 = vsel %vm230, %v553, 0
    %v708 = vsel %vm559, %v703, 0
    %710 = vmatpush.bf16.msra.mxu0 0
    %711 = vmatpush.bf16.msra.mxu0 0
    %712 = vmatpush.bf16.msra.mxu0 0
    %713 = vmatpush.bf16.msra.mxu0 0
    %714 = vmatpush.bf16.msra.mxu0 0
    %715 = vmatpush.bf16.msra.mxu0 0
    %716 = vmatpush.bf16.msra.mxu0 0
    %717 = vmatpush.bf16.msra.mxu0 %v708
    %718 = vmatmul.bf16.gmra.mxu0 %v705
    %v719 = vpop.f32.mrf.mxu0
    %v720 = vadd.f32 0.0, %v719
    %v721 = vpop.f32.mrf.mxu0
    %722 = vdwg.mxu0
    %725 = vrot.lane.b32.xlu0 %v615, 8
    %v726 = vpop.permute.xlu0 %725
    %727 = vrot.lane.b32.xlu0 %v636, 8
    %v728 = vpop.permute.xlu0 %727
    %733 = vrot.lane.b32.xlu0 %v657, 16
    %v734 = vpop.permute.xlu0 %733
    %735 = vrot.lane.b32.xlu0 %v678, 16
    %v736 = vpop.permute.xlu0 %735
    %741 = vrot.lane.b32.xlu0 %v699, 24
    %v742 = vpop.permute.xlu0 %741
    %743 = vrot.lane.b32.xlu0 %v720, 24
    %v744 = vpop.permute.xlu0 %743
    %v747 = vsel %vm230, %v573, %v726
    %v748 = vsel %vm230, %v594, %v728
    %vm749 = vcmask 130048
    %v750 = vsel %vm749, %v747, %v734
    %v751 = vsel %vm749, %v748, %v736
    %vm752 = vcmask 195584
    %v753 = vsel %vm752, %v750, %v742
    %v754 = vsel %vm752, %v751, %v744
    %v755 = vpack.c.bf16 %v754, %v753
    %v756 = vld [vmem:[%s7] sm:$0xf]
    %v757 = vld [vmem:[%s7 + $0x4] sm:$0xf]
    %v758 = vld [vmem:[%s7 + $0x8] sm:$0xf]
    %v759 = vld [vmem:[%s7 + $0xc] sm:$0xf]
    %v760 = vld [vmem:[%s8] sm:$0x1]
    %v762 = vperm.slane %v760, 0
    %v768 = vunpack.c.l.b16 %v756
    %v769 = vunpack.c.l.b16 %v757
    %v770 = vunpack.c.l.b16 %v758
    %v771 = vunpack.c.l.b16 %v759
    %v772 = vpack.c.b16 %v769, %v768
    %v773 = vpack.c.b16 %v771, %v770
    %v777 = vsel %vm89, %v755, 0
    %779 = vmatpush.bf16.msra.mxu0 0
    %780 = vmatpush.bf16.msra.mxu0 0
    %781 = vmatpush.bf16.msra.mxu0 0
    %782 = vmatpush.bf16.msra.mxu0 0
    %783 = vmatpush.bf16.msra.mxu0 0
    %784 = vmatpush.bf16.msra.mxu0 0
    %785 = vmatpush.bf16.msra.mxu0 %v773
    %786 = vmatpush.bf16.msra.mxu0 %v772
    %787 = vmatmul.bf16.gmra.mxu0 %v777
    %v788 = vpop.f32.mrf.mxu0
    %v789 = vadd.f32 %v762, %v788
    %v790 = vpop.f32.mrf.mxu0
    %v791 = vadd.f32 %v762, %v790
    %792 = vdwg.mxu0
    %v793 = vadd.f32 %v149, %v789
    %v794 = vadd.f32 %v150, %v791
    %v795 = vld [vmem:[%s9] sm:$0x1]
    %v796 = vld [vmem:[%s10] sm:$0x1]
    %v797 = vsel %vm89, %v793, 0.0
    %798 = vadd.xlane.f32.xlu0 %v797
    %v799 = vpop.xlane.xlu0 %798
    %v800 = vsel %vm89, %v794, 0.0
    %801 = vadd.xlane.f32.xlu0 %v800
    %v802 = vpop.xlane.xlu0 %801
    %v803 = vmul.f32 %v799, %v102
    %v804 = vmul.f32 %v802, %v102
    %v805 = vsub.f32 %v793, %v803
    %v806 = vsub.f32 %v794, %v804
    %v807 = vmul.f32 %v805, %v805
    %v808 = vmul.f32 %v806, %v806
    %v809 = vsel %vm89, %v807, 0.0
    %810 = vadd.xlane.f32.xlu0 %v809
    %v811 = vpop.xlane.xlu0 %810
    %v812 = vsel %vm89, %v808, 0.0
    %813 = vadd.xlane.f32.xlu0 %v812
    %v814 = vpop.xlane.xlu0 %813
    %v815 = vmul.f32 %v811, %v102
    %v816 = vmul.f32 %v814, %v102
    %v817 = vadd.f32 %v815, 1e-12
    %v818 = vadd.f32 %v816, 1e-12
    %v819 = vrsqrt.pop %v817
    %v820 = vmul.f32 %v819, %v817
    %v821 = vmul.f32 %v820, %v819
    %v822 = vmul.f32 0.5, %v821
    %v823 = vsub.f32 1.5, %v822
    %v824 = vmul.f32 %v819, %v823
    %vm825 = vweird.f32 %v817
    %vm826 = vweird.f32 %v819
    %vm827 = vmor %vm825, %vm826
    %v828 = vsel %vm827, %v819, %v824
    %v829 = vrsqrt.pop %v818
    %v830 = vmul.f32 %v829, %v818
    %v831 = vmul.f32 %v830, %v829
    %v832 = vmul.f32 0.5, %v831
    %v833 = vsub.f32 1.5, %v832
    %v834 = vmul.f32 %v829, %v833
    %vm835 = vweird.f32 %v818
    %vm836 = vweird.f32 %v829
    %vm837 = vmor %vm835, %vm836
    %v838 = vsel %vm837, %v829, %v834
    %v839 = vmul.f32 %v805, %v828
    %v840 = vmul.f32 %v806, %v838
    %v842 = vperm.slane %v795, 0
    %v844 = vmul.f32 %v839, %v842
    %v845 = vmul.f32 %v840, %v842
    %v847 = vperm.slane %v796, 0
    %v849 = vadd.f32 %v844, %v847
    %v850 = vadd.f32 %v845, %v847
    %v851 = vpack.c.bf16 %v850, %v849
    %v852 = vld [vmem:[%s11] sm:$0xf]
    %v853 = vld [vmem:[%s11 + $0x4] sm:$0xf]
    %v854 = vld [vmem:[%s11 + $0x8] sm:$0xf]
    %v855 = vld [vmem:[%s11 + $0xc] sm:$0xf]
    %v856 = vld [vmem:[%s12] sm:$0x1]
    %v858 = vperm.slane %v856, 0
    %v864 = vunpack.c.l.b16 %v852
    %v865 = vunpack.c.l.b16 %v853
    %v866 = vunpack.c.l.b16 %v854
    %v867 = vunpack.c.l.b16 %v855
    %v868 = vpack.c.b16 %v865, %v864
    %v869 = vpack.c.b16 %v867, %v866
    %v873 = vsel %vm89, %v851, 0
    %875 = vmatpush.bf16.msra.mxu0 0
    %876 = vmatpush.bf16.msra.mxu0 0
    %877 = vmatpush.bf16.msra.mxu0 0
    %878 = vmatpush.bf16.msra.mxu0 0
    %879 = vmatpush.bf16.msra.mxu0 0
    %880 = vmatpush.bf16.msra.mxu0 0
    %881 = vmatpush.bf16.msra.mxu0 %v869
    %882 = vmatpush.bf16.msra.mxu0 %v868
    %883 = vmatmul.bf16.gmra.mxu0 %v873
    %v884 = vpop.f32.mrf.mxu0
    %v885 = vadd.f32 %v858, %v884
    %v886 = vpop.f32.mrf.mxu0
    %v887 = vadd.f32 %v858, %v886
    %888 = vdwg.mxu0
    %v889 = vmul.f32 %v885, 0.5
    %v890 = vmul.f32 %v887, 0.5
    %v891 = vmul.f32 %v885, 0.044715
    %v892 = vmul.f32 %v887, 0.044715
    %v893 = vmul.f32 %v891, %v885
    %v894 = vmul.f32 %v892, %v887
    %v895 = vmul.f32 %v893, %v885
    %v896 = vmul.f32 %v894, %v887
    %v897 = vadd.f32 %v885, %v895
    %v898 = vadd.f32 %v887, %v896
    %v899 = vmul.f32 %v897, 0.7978846
    %v900 = vmul.f32 %v898, 0.7978846
    %v901 = vtanh.pop %v899
    %v902 = vtanh.pop %v900
    %v903 = vadd.f32 %v901, 1.0
    %v904 = vadd.f32 %v902, 1.0
    %v905 = vmul.f32 %v889, %v903
    %v906 = vmul.f32 %v890, %v904
    %v907 = vpack.c.bf16 %v906, %v905
    %v908 = vld [vmem:[%s13] sm:$0xf]
    %v909 = vld [vmem:[%s13 + $0x4] sm:$0xf]
    %v910 = vld [vmem:[%s13 + $0x8] sm:$0xf]
    %v911 = vld [vmem:[%s13 + $0xc] sm:$0xf]
    %v912 = vld [vmem:[%s13 + $0x10] sm:$0xf]
    %v913 = vld [vmem:[%s13 + $0x14] sm:$0xf]
    %v914 = vld [vmem:[%s13 + $0x18] sm:$0xf]
    %v915 = vld [vmem:[%s13 + $0x1c] sm:$0xf]
    %v916 = vld [vmem:[%s14] sm:$0x1]
    %v918 = vperm.slane %v916, 0
    %v928 = vunpack.c.l.b16 %v908
    %v929 = vunpack.c.l.b16 %v909
    %v930 = vunpack.c.l.b16 %v910
    %v931 = vunpack.c.l.b16 %v911
    %v932 = vunpack.c.l.b16 %v912
    %v933 = vunpack.c.l.b16 %v913
    %v934 = vunpack.c.l.b16 %v914
    %v935 = vunpack.c.l.b16 %v915
    %v936 = vpack.c.b16 %v929, %v928
    %v937 = vpack.c.b16 %v931, %v930
    %v938 = vpack.c.b16 %v933, %v932
    %v939 = vpack.c.b16 %v935, %v934
    %vm944 = vcmask 523264
    %v946 = vsel %vm944, %v907, 0
    %948 = vmatpush.bf16.msra.mxu0 0
    %949 = vmatpush.bf16.msra.mxu0 0
    %950 = vmatpush.bf16.msra.mxu0 0
    %951 = vmatpush.bf16.msra.mxu0 0
    %952 = vmatpush.bf16.msra.mxu0 %v939
    %953 = vmatpush.bf16.msra.mxu0 %v938
    %954 = vmatpush.bf16.msra.mxu0 %v937
    %955 = vmatpush.bf16.msra.mxu0 %v936
    %956 = vmatmul.bf16.gmra.mxu0 %v946
    %v957 = vpop.f32.mrf.mxu0
    %v958 = vadd.f32 %v918, %v957
    %v959 = vpop.f32.mrf.mxu0
    %v960 = vadd.f32 %v918, %v959
    %961 = vdwg.mxu0
    %v962 = vadd.f32 %v849, %v958
    %v963 = vadd.f32 %v850, %v960
    %v964 = vld [vmem:[%s15] sm:$0x1]
    %v965 = vld [vmem:[%s16] sm:$0x1]
    %v966 = vsel %vm89, %v962, 0.0
    %967 = vadd.xlane.f32.xlu0 %v966
    %v968 = vpop.xlane.xlu0 %967
    %v969 = vsel %vm89, %v963, 0.0
    %970 = vadd.xlane.f32.xlu0 %v969
    %v971 = vpop.xlane.xlu0 %970
    %v972 = vmul.f32 %v968, %v102
    %v973 = vmul.f32 %v971, %v102
    %v974 = vsub.f32 %v962, %v972
    %v975 = vsub.f32 %v963, %v973
    %v976 = vmul.f32 %v974, %v974
    %v977 = vmul.f32 %v975, %v975
    %v978 = vsel %vm89, %v976, 0.0
    %979 = vadd.xlane.f32.xlu0 %v978
    %v980 = vpop.xlane.xlu0 %979
    %v981 = vsel %vm89, %v977, 0.0
    %982 = vadd.xlane.f32.xlu0 %v981
    %v983 = vpop.xlane.xlu0 %982
    %v984 = vmul.f32 %v980, %v102
    %v985 = vmul.f32 %v983, %v102
    %v986 = vadd.f32 %v984, 1e-12
    %v987 = vadd.f32 %v985, 1e-12
    %v988 = vrsqrt.pop %v986
    %v989 = vmul.f32 %v988, %v986
    %v990 = vmul.f32 %v989, %v988
    %v991 = vmul.f32 0.5, %v990
    %v992 = vsub.f32 1.5, %v991
    %v993 = vmul.f32 %v988, %v992
    %vm994 = vweird.f32 %v986
    %vm995 = vweird.f32 %v988
    %vm996 = vmor %vm994, %vm995
    %v997 = vsel %vm996, %v988, %v993
    %v998 = vrsqrt.pop %v987
    %v999 = vmul.f32 %v998, %v987
    %v1000 = vmul.f32 %v999, %v998
    %v1001 = vmul.f32 0.5, %v1000
    %v1002 = vsub.f32 1.5, %v1001
    %v1003 = vmul.f32 %v998, %v1002
    %vm1004 = vweird.f32 %v987
    %vm1005 = vweird.f32 %v998
    %vm1006 = vmor %vm1004, %vm1005
    %v1007 = vsel %vm1006, %v998, %v1003
    %v1008 = vmul.f32 %v974, %v997
    %v1009 = vmul.f32 %v975, %v1007
    %v1011 = vperm.slane %v964, 0
    %v1013 = vmul.f32 %v1008, %v1011
    %v1014 = vmul.f32 %v1009, %v1011
    %v1016 = vperm.slane %v965, 0
    %v1018 = vadd.f32 %v1013, %v1016
    %v1019 = vadd.f32 %v1014, %v1016
    %v1020 = vpack.c.bf16 %v1019, %v1018
    %s1021 = scalar_lea.vmem %s5, 16
    %v1022 = vld [vmem:[%s1021] sm:$0xf]
    %v1023 = vld [vmem:[%s1021 + $0x4] sm:$0xf]
    %v1024 = vld [vmem:[%s1021 + $0x8] sm:$0xf]
    %v1025 = vld [vmem:[%s1021 + $0xc] sm:$0xf]
    %s1026 = scalar_lea.vmem %s6, 1
    %v1027 = vld [vmem:[%s1026] sm:$0x1]
    %v1029 = vperm.slane %v1027, 0
    %v1035 = vunpack.c.l.b16 %v1022
    %v1036 = vunpack.c.l.b16 %v1023
    %v1037 = vunpack.c.l.b16 %v1024
    %v1038 = vunpack.c.l.b16 %v1025
    %v1039 = vpack.c.b16 %v1036, %v1035
    %v1040 = vpack.c.b16 %v1038, %v1037
    %v1044 = vsel %vm89, %v1020, 0
    %1046 = vmatpush.bf16.msra.mxu0 0
    %1047 = vmatpush.bf16.msra.mxu0 0
    %1048 = vmatpush.bf16.msra.mxu0 0
    %1049 = vmatpush.bf16.msra.mxu0 0
    %1050 = vmatpush.bf16.msra.mxu0 0
    %1051 = vmatpush.bf16.msra.mxu0 0
    %1052 = vmatpush.bf16.msra.mxu0 %v1040
    %1053 = vmatpush.bf16.msra.mxu0 %v1039
    %1054 = vmatmul.bf16.gmra.mxu0 %v1044
    %v1055 = vpop.f32.mrf.mxu0
    %v1056 = vadd.f32 %v1029, %v1055
    %v1057 = vpop.f32.mrf.mxu0
    %v1058 = vadd.f32 %v1029, %v1057
    %1059 = vdwg.mxu0
    %1062 = vrot.lane.b32.xlu0 %v1056, 120
    %v1063 = vpop.permute.xlu0 %1062
    %1064 = vrot.lane.b32.xlu0 %v1058, 120
    %v1065 = vpop.permute.xlu0 %1064
    %1068 = vrot.lane.b32.xlu0 %v1056, 112
    %v1069 = vpop.permute.xlu0 %1068
    %1070 = vrot.lane.b32.xlu0 %v1058, 112
    %v1071 = vpop.permute.xlu0 %1070
    %1074 = vrot.lane.b32.xlu0 %v1056, 104
    %v1075 = vpop.permute.xlu0 %1074
    %1076 = vrot.lane.b32.xlu0 %v1058, 104
    %v1077 = vpop.permute.xlu0 %1076
    %v1080 = vpack.c.bf16 %v1056, %v1056
    %v1081 = vpack.c.bf16 %v1058, %v1058
    %v1082 = vpack.c.bf16 %v1063, %v1063
    %v1083 = vpack.c.bf16 %v1065, %v1065
    %v1084 = vpack.c.bf16 %v1069, %v1069
    %v1085 = vpack.c.bf16 %v1071, %v1071
    %v1086 = vpack.c.bf16 %v1075, %v1075
    %v1087 = vpack.c.bf16 %v1077, %v1077
    %v1089 = vunpack.c.l.b16 %v1080
    %v1090 = vpack.c.b16 %v1089, %v1089
    %1091 = vrot.lane.b32.xlu0 %v1090, 96
    %v1092 = vpop.permute.xlu0 %1091
    %v1094 = vsel %vm230, %v1080, 0
    %v1097 = vsel %vm230, %v1092, 0
    %1099 = vmatpush.bf16.xpose.msra.mxu0 0
    %1100 = vmatpush.bf16.xpose.msra.mxu0 0
    %1101 = vmatpush.bf16.xpose.msra.mxu0 0
    %1102 = vmatpush.bf16.xpose.msra.mxu0 0
    %1103 = vmatpush.bf16.xpose.msra.mxu0 0
    %1104 = vmatpush.bf16.xpose.msra.mxu0 0
    %1105 = vmatpush.bf16.xpose.msra.mxu0 0
    %1106 = vmatpush.bf16.xpose.msra.mxu0 %v1097
    %1107 = vmatmul.bf16.gmra.mxu0 %v1094
    %v1108 = vpop.f32.mrf.mxu0
    %v1109 = vadd.f32 0.0, %v1108
    %v1110 = vpop.f32.mrf.mxu0
    %1111 = vdwg.mxu0
    %v1113 = vunpack.c.l.b16 %v1081
    %v1114 = vpack.c.b16 %v1113, %v1113
    %1115 = vrot.lane.b32.xlu0 %v1114, 96
    %v1116 = vpop.permute.xlu0 %1115
    %v1118 = vsel %vm230, %v1081, 0
    %v1121 = vsel %vm230, %v1116, 0
    %1123 = vmatpush.bf16.xpose.msra.mxu0 0
    %1124 = vmatpush.bf16.xpose.msra.mxu0 0
    %1125 = vmatpush.bf16.xpose.msra.mxu0 0
    %1126 = vmatpush.bf16.xpose.msra.mxu0 0
    %1127 = vmatpush.bf16.xpose.msra.mxu0 0
    %1128 = vmatpush.bf16.xpose.msra.mxu0 0
    %1129 = vmatpush.bf16.xpose.msra.mxu0 0
    %1130 = vmatpush.bf16.xpose.msra.mxu0 %v1121
    %1131 = vmatmul.bf16.gmra.mxu0 %v1118
    %v1132 = vpop.f32.mrf.mxu0
    %v1133 = vadd.f32 0.0, %v1132
    %v1134 = vpop.f32.mrf.mxu0
    %1135 = vdwg.mxu0
    %v1137 = vunpack.c.l.b16 %v1082
    %v1138 = vpack.c.b16 %v1137, %v1137
    %1139 = vrot.lane.b32.xlu0 %v1138, 96
    %v1140 = vpop.permute.xlu0 %1139
    %v1142 = vsel %vm230, %v1082, 0
    %v1145 = vsel %vm230, %v1140, 0
    %1147 = vmatpush.bf16.xpose.msra.mxu0 0
    %1148 = vmatpush.bf16.xpose.msra.mxu0 0
    %1149 = vmatpush.bf16.xpose.msra.mxu0 0
    %1150 = vmatpush.bf16.xpose.msra.mxu0 0
    %1151 = vmatpush.bf16.xpose.msra.mxu0 0
    %1152 = vmatpush.bf16.xpose.msra.mxu0 0
    %1153 = vmatpush.bf16.xpose.msra.mxu0 0
    %1154 = vmatpush.bf16.xpose.msra.mxu0 %v1145
    %1155 = vmatmul.bf16.gmra.mxu0 %v1142
    %v1156 = vpop.f32.mrf.mxu0
    %v1157 = vadd.f32 0.0, %v1156
    %v1158 = vpop.f32.mrf.mxu0
    %1159 = vdwg.mxu0
    %v1161 = vunpack.c.l.b16 %v1083
    %v1162 = vpack.c.b16 %v1161, %v1161
    %1163 = vrot.lane.b32.xlu0 %v1162, 96
    %v1164 = vpop.permute.xlu0 %1163
    %v1166 = vsel %vm230, %v1083, 0
    %v1169 = vsel %vm230, %v1164, 0
    %1171 = vmatpush.bf16.xpose.msra.mxu0 0
    %1172 = vmatpush.bf16.xpose.msra.mxu0 0
    %1173 = vmatpush.bf16.xpose.msra.mxu0 0
    %1174 = vmatpush.bf16.xpose.msra.mxu0 0
    %1175 = vmatpush.bf16.xpose.msra.mxu0 0
    %1176 = vmatpush.bf16.xpose.msra.mxu0 0
    %1177 = vmatpush.bf16.xpose.msra.mxu0 0
    %1178 = vmatpush.bf16.xpose.msra.mxu0 %v1169
    %1179 = vmatmul.bf16.gmra.mxu0 %v1166
    %v1180 = vpop.f32.mrf.mxu0
    %v1181 = vadd.f32 0.0, %v1180
    %v1182 = vpop.f32.mrf.mxu0
    %1183 = vdwg.mxu0
    %v1185 = vunpack.c.l.b16 %v1084
    %v1186 = vpack.c.b16 %v1185, %v1185
    %1187 = vrot.lane.b32.xlu0 %v1186, 96
    %v1188 = vpop.permute.xlu0 %1187
    %v1190 = vsel %vm230, %v1084, 0
    %v1193 = vsel %vm230, %v1188, 0
    %1195 = vmatpush.bf16.xpose.msra.mxu0 0
    %1196 = vmatpush.bf16.xpose.msra.mxu0 0
    %1197 = vmatpush.bf16.xpose.msra.mxu0 0
    %1198 = vmatpush.bf16.xpose.msra.mxu0 0
    %1199 = vmatpush.bf16.xpose.msra.mxu0 0
    %1200 = vmatpush.bf16.xpose.msra.mxu0 0
    %1201 = vmatpush.bf16.xpose.msra.mxu0 0
    %1202 = vmatpush.bf16.xpose.msra.mxu0 %v1193
    %1203 = vmatmul.bf16.gmra.mxu0 %v1190
    %v1204 = vpop.f32.mrf.mxu0
    %v1205 = vadd.f32 0.0, %v1204
    %v1206 = vpop.f32.mrf.mxu0
    %1207 = vdwg.mxu0
    %v1209 = vunpack.c.l.b16 %v1085
    %v1210 = vpack.c.b16 %v1209, %v1209
    %1211 = vrot.lane.b32.xlu0 %v1210, 96
    %v1212 = vpop.permute.xlu0 %1211
    %v1214 = vsel %vm230, %v1085, 0
    %v1217 = vsel %vm230, %v1212, 0
    %1219 = vmatpush.bf16.xpose.msra.mxu0 0
    %1220 = vmatpush.bf16.xpose.msra.mxu0 0
    %1221 = vmatpush.bf16.xpose.msra.mxu0 0
    %1222 = vmatpush.bf16.xpose.msra.mxu0 0
    %1223 = vmatpush.bf16.xpose.msra.mxu0 0
    %1224 = vmatpush.bf16.xpose.msra.mxu0 0
    %1225 = vmatpush.bf16.xpose.msra.mxu0 0
    %1226 = vmatpush.bf16.xpose.msra.mxu0 %v1217
    %1227 = vmatmul.bf16.gmra.mxu0 %v1214
    %v1228 = vpop.f32.mrf.mxu0
    %v1229 = vadd.f32 0.0, %v1228
    %v1230 = vpop.f32.mrf.mxu0
    %1231 = vdwg.mxu0
    %v1233 = vunpack.c.l.b16 %v1086
    %v1234 = vpack.c.b16 %v1233, %v1233
    %1235 = vrot.lane.b32.xlu0 %v1234, 96
    %v1236 = vpop.permute.xlu0 %1235
    %v1238 = vsel %vm230, %v1086, 0
    %v1241 = vsel %vm230, %v1236, 0
    %1243 = vmatpush.bf16.xpose.msra.mxu0 0
    %1244 = vmatpush.bf16.xpose.msra.mxu0 0
    %1245 = vmatpush.bf16.xpose.msra.mxu0 0
    %1246 = vmatpush.bf16.xpose.msra.mxu0 0
    %1247 = vmatpush.bf16.xpose.msra.mxu0 0
    %1248 = vmatpush.bf16.xpose.msra.mxu0 0
    %1249 = vmatpush.bf16.xpose.msra.mxu0 0
    %1250 = vmatpush.bf16.xpose.msra.mxu0 %v1241
    %1251 = vmatmul.bf16.gmra.mxu0 %v1238
    %v1252 = vpop.f32.mrf.mxu0
    %v1253 = vadd.f32 0.0, %v1252
    %v1254 = vpop.f32.mrf.mxu0
    %1255 = vdwg.mxu0
    %v1257 = vunpack.c.l.b16 %v1087
    %v1258 = vpack.c.b16 %v1257, %v1257
    %1259 = vrot.lane.b32.xlu0 %v1258, 96
    %v1260 = vpop.permute.xlu0 %1259
    %v1262 = vsel %vm230, %v1087, 0
    %v1265 = vsel %vm230, %v1260, 0
    %1267 = vmatpush.bf16.xpose.msra.mxu0 0
    %1268 = vmatpush.bf16.xpose.msra.mxu0 0
    %1269 = vmatpush.bf16.xpose.msra.mxu0 0
    %1270 = vmatpush.bf16.xpose.msra.mxu0 0
    %1271 = vmatpush.bf16.xpose.msra.mxu0 0
    %1272 = vmatpush.bf16.xpose.msra.mxu0 0
    %1273 = vmatpush.bf16.xpose.msra.mxu0 0
    %1274 = vmatpush.bf16.xpose.msra.mxu0 %v1265
    %1275 = vmatmul.bf16.gmra.mxu0 %v1262
    %v1276 = vpop.f32.mrf.mxu0
    %v1277 = vadd.f32 0.0, %v1276
    %v1278 = vpop.f32.mrf.mxu0
    %1279 = vdwg.mxu0
    %v1280 = vmul.f32 %v1109, 0.35355338
    %v1281 = vmul.f32 %v1133, 0.35355338
    %v1282 = vmul.f32 %v1157, 0.35355338
    %v1283 = vmul.f32 %v1181, 0.35355338
    %v1284 = vmul.f32 %v1205, 0.35355338
    %v1285 = vmul.f32 %v1229, 0.35355338
    %v1286 = vmul.f32 %v1253, 0.35355338
    %v1287 = vmul.f32 %v1277, 0.35355338
    %v1288 = vadd.f32 %v1280, %v434
    %v1289 = vadd.f32 %v1281, %v435
    %v1290 = vadd.f32 %v1282, %v436
    %v1291 = vadd.f32 %v1283, %v437
    %v1292 = vadd.f32 %v1284, %v438
    %v1293 = vadd.f32 %v1285, %v439
    %v1294 = vadd.f32 %v1286, %v440
    %v1295 = vadd.f32 %v1287, %v441
    %v1296 = vsel %vm230, %v1288, -inf
    %1297 = vmax.xlane.f32.xlu0 %v1296
    %v1298 = vpop.xlane.xlu0 %1297
    %v1299 = vsel %vm230, %v1289, -inf
    %1300 = vmax.xlane.f32.xlu0 %v1299
    %v1301 = vpop.xlane.xlu0 %1300
    %v1302 = vsel %vm230, %v1290, -inf
    %1303 = vmax.xlane.f32.xlu0 %v1302
    %v1304 = vpop.xlane.xlu0 %1303
    %v1305 = vsel %vm230, %v1291, -inf
    %1306 = vmax.xlane.f32.xlu0 %v1305
    %v1307 = vpop.xlane.xlu0 %1306
    %v1308 = vsel %vm230, %v1292, -inf
    %1309 = vmax.xlane.f32.xlu0 %v1308
    %v1310 = vpop.xlane.xlu0 %1309
    %v1311 = vsel %vm230, %v1293, -inf
    %1312 = vmax.xlane.f32.xlu0 %v1311
    %v1313 = vpop.xlane.xlu0 %1312
    %v1314 = vsel %vm230, %v1294, -inf
    %1315 = vmax.xlane.f32.xlu0 %v1314
    %v1316 = vpop.xlane.xlu0 %1315
    %v1317 = vsel %vm230, %v1295, -inf
    %1318 = vmax.xlane.f32.xlu0 %v1317
    %v1319 = vpop.xlane.xlu0 %1318
    %v1320 = vsub.f32 %v1288, %v1298
    %v1321 = vsub.f32 %v1289, %v1301
    %v1322 = vsub.f32 %v1290, %v1304
    %v1323 = vsub.f32 %v1291, %v1307
    %v1324 = vsub.f32 %v1292, %v1310
    %v1325 = vsub.f32 %v1293, %v1313
    %v1326 = vsub.f32 %v1294, %v1316
    %v1327 = vsub.f32 %v1295, %v1319
    %v1328 = vmul.f32 %v1320, 1.442695
    %v1329 = vpow.pop %v1328
    %v1330 = vmul.f32 %v1321, 1.442695
    %v1331 = vpow.pop %v1330
    %v1332 = vmul.f32 %v1322, 1.442695
    %v1333 = vpow.pop %v1332
    %v1334 = vmul.f32 %v1323, 1.442695
    %v1335 = vpow.pop %v1334
    %v1336 = vmul.f32 %v1324, 1.442695
    %v1337 = vpow.pop %v1336
    %v1338 = vmul.f32 %v1325, 1.442695
    %v1339 = vpow.pop %v1338
    %v1340 = vmul.f32 %v1326, 1.442695
    %v1341 = vpow.pop %v1340
    %v1342 = vmul.f32 %v1327, 1.442695
    %v1343 = vpow.pop %v1342
    %v1344 = vsel %vm230, %v1329, 0.0
    %1345 = vadd.xlane.f32.xlu0 %v1344
    %v1346 = vpop.xlane.xlu0 %1345
    %v1347 = vsel %vm230, %v1331, 0.0
    %1348 = vadd.xlane.f32.xlu0 %v1347
    %v1349 = vpop.xlane.xlu0 %1348
    %v1350 = vsel %vm230, %v1333, 0.0
    %1351 = vadd.xlane.f32.xlu0 %v1350
    %v1352 = vpop.xlane.xlu0 %1351
    %v1353 = vsel %vm230, %v1335, 0.0
    %1354 = vadd.xlane.f32.xlu0 %v1353
    %v1355 = vpop.xlane.xlu0 %1354
    %v1356 = vsel %vm230, %v1337, 0.0
    %1357 = vadd.xlane.f32.xlu0 %v1356
    %v1358 = vpop.xlane.xlu0 %1357
    %v1359 = vsel %vm230, %v1339, 0.0
    %1360 = vadd.xlane.f32.xlu0 %v1359
    %v1361 = vpop.xlane.xlu0 %1360
    %v1362 = vsel %vm230, %v1341, 0.0
    %1363 = vadd.xlane.f32.xlu0 %v1362
    %v1364 = vpop.xlane.xlu0 %1363
    %v1365 = vsel %vm230, %v1343, 0.0
    %1366 = vadd.xlane.f32.xlu0 %v1365
    %v1367 = vpop.xlane.xlu0 %1366
    %v1368 = vrcp.pop %v1346
    %v1369 = vrcp.pop %v1349
    %v1370 = vrcp.pop %v1352
    %v1371 = vrcp.pop %v1355
    %v1372 = vrcp.pop %v1358
    %v1373 = vrcp.pop %v1361
    %v1374 = vrcp.pop %v1364
    %v1375 = vrcp.pop %v1367
    %v1376 = vmul.f32 %v1329, %v1368
    %v1377 = vmul.f32 %v1331, %v1369
    %v1378 = vmul.f32 %v1333, %v1370
    %v1379 = vmul.f32 %v1335, %v1371
    %v1380 = vmul.f32 %v1337, %v1372
    %v1381 = vmul.f32 %v1339, %v1373
    %v1382 = vmul.f32 %v1341, %v1374
    %v1383 = vmul.f32 %v1343, %v1375
    %v1384 = vpack.c.bf16 %v1376, %v1376
    %v1385 = vpack.c.bf16 %v1377, %v1377
    %v1386 = vpack.c.bf16 %v1378, %v1378
    %v1387 = vpack.c.bf16 %v1379, %v1379
    %v1388 = vpack.c.bf16 %v1380, %v1380
    %v1389 = vpack.c.bf16 %v1381, %v1381
    %v1390 = vpack.c.bf16 %v1382, %v1382
    %v1391 = vpack.c.bf16 %v1383, %v1383
    %1392 = vrot.lane.b32.xlu0 %v1090, 64
    %v1393 = vpop.permute.xlu0 %1392
    %v1395 = vsel %vm230, %v1384, 0
    %v1398 = vsel %vm559, %v1393, 0
    %1400 = vmatpush.bf16.msra.mxu0 0
    %1401 = vmatpush.bf16.msra.mxu0 0
    %1402 = vmatpush.bf16.msra.mxu0 0
    %1403 = vmatpush.bf16.msra.mxu0 0
    %1404 = vmatpush.bf16.msra.mxu0 0
    %1405 = vmatpush.bf16.msra.mxu0 0
    %1406 = vmatpush.bf16.msra.mxu0 0
    %1407 = vmatpush.bf16.msra.mxu0 %v1398
    %1408 = vmatmul.bf16.gmra.mxu0 %v1395
    %v1409 = vpop.f32.mrf.mxu0
    %v1410 = vadd.f32 0.0, %v1409
    %v1411 = vpop.f32.mrf.mxu0
    %1412 = vdwg.mxu0
    %1413 = vrot.lane.b32.xlu0 %v1114, 64
    %v1414 = vpop.permute.xlu0 %1413
    %v1416 = vsel %vm230, %v1385, 0
    %v1419 = vsel %vm559, %v1414, 0
    %1421 = vmatpush.bf16.msra.mxu0 0
    %1422 = vmatpush.bf16.msra.mxu0 0
    %1423 = vmatpush.bf16.msra.mxu0 0
    %1424 = vmatpush.bf16.msra.mxu0 0
    %1425 = vmatpush.bf16.msra.mxu0 0
    %1426 = vmatpush.bf16.msra.mxu0 0
    %1427 = vmatpush.bf16.msra.mxu0 0
    %1428 = vmatpush.bf16.msra.mxu0 %v1419
    %1429 = vmatmul.bf16.gmra.mxu0 %v1416
    %v1430 = vpop.f32.mrf.mxu0
    %v1431 = vadd.f32 0.0, %v1430
    %v1432 = vpop.f32.mrf.mxu0
    %1433 = vdwg.mxu0
    %1434 = vrot.lane.b32.xlu0 %v1138, 64
    %v1435 = vpop.permute.xlu0 %1434
    %v1437 = vsel %vm230, %v1386, 0
    %v1440 = vsel %vm559, %v1435, 0
    %1442 = vmatpush.bf16.msra.mxu0 0
    %1443 = vmatpush.bf16.msra.mxu0 0
    %1444 = vmatpush.bf16.msra.mxu0 0
    %1445 = vmatpush.bf16.msra.mxu0 0
    %1446 = vmatpush.bf16.msra.mxu0 0
    %1447 = vmatpush.bf16.msra.mxu0 0
    %1448 = vmatpush.bf16.msra.mxu0 0
    %1449 = vmatpush.bf16.msra.mxu0 %v1440
    %1450 = vmatmul.bf16.gmra.mxu0 %v1437
    %v1451 = vpop.f32.mrf.mxu0
    %v1452 = vadd.f32 0.0, %v1451
    %v1453 = vpop.f32.mrf.mxu0
    %1454 = vdwg.mxu0
    %1455 = vrot.lane.b32.xlu0 %v1162, 64
    %v1456 = vpop.permute.xlu0 %1455
    %v1458 = vsel %vm230, %v1387, 0
    %v1461 = vsel %vm559, %v1456, 0
    %1463 = vmatpush.bf16.msra.mxu0 0
    %1464 = vmatpush.bf16.msra.mxu0 0
    %1465 = vmatpush.bf16.msra.mxu0 0
    %1466 = vmatpush.bf16.msra.mxu0 0
    %1467 = vmatpush.bf16.msra.mxu0 0
    %1468 = vmatpush.bf16.msra.mxu0 0
    %1469 = vmatpush.bf16.msra.mxu0 0
    %1470 = vmatpush.bf16.msra.mxu0 %v1461
    %1471 = vmatmul.bf16.gmra.mxu0 %v1458
    %v1472 = vpop.f32.mrf.mxu0
    %v1473 = vadd.f32 0.0, %v1472
    %v1474 = vpop.f32.mrf.mxu0
    %1475 = vdwg.mxu0
    %1476 = vrot.lane.b32.xlu0 %v1186, 64
    %v1477 = vpop.permute.xlu0 %1476
    %v1479 = vsel %vm230, %v1388, 0
    %v1482 = vsel %vm559, %v1477, 0
    %1484 = vmatpush.bf16.msra.mxu0 0
    %1485 = vmatpush.bf16.msra.mxu0 0
    %1486 = vmatpush.bf16.msra.mxu0 0
    %1487 = vmatpush.bf16.msra.mxu0 0
    %1488 = vmatpush.bf16.msra.mxu0 0
    %1489 = vmatpush.bf16.msra.mxu0 0
    %1490 = vmatpush.bf16.msra.mxu0 0
    %1491 = vmatpush.bf16.msra.mxu0 %v1482
    %1492 = vmatmul.bf16.gmra.mxu0 %v1479
    %v1493 = vpop.f32.mrf.mxu0
    %v1494 = vadd.f32 0.0, %v1493
    %v1495 = vpop.f32.mrf.mxu0
    %1496 = vdwg.mxu0
    %1497 = vrot.lane.b32.xlu0 %v1210, 64
    %v1498 = vpop.permute.xlu0 %1497
    %v1500 = vsel %vm230, %v1389, 0
    %v1503 = vsel %vm559, %v1498, 0
    %1505 = vmatpush.bf16.msra.mxu0 0
    %1506 = vmatpush.bf16.msra.mxu0 0
    %1507 = vmatpush.bf16.msra.mxu0 0
    %1508 = vmatpush.bf16.msra.mxu0 0
    %1509 = vmatpush.bf16.msra.mxu0 0
    %1510 = vmatpush.bf16.msra.mxu0 0
    %1511 = vmatpush.bf16.msra.mxu0 0
    %1512 = vmatpush.bf16.msra.mxu0 %v1503
    %1513 = vmatmul.bf16.gmra.mxu0 %v1500
    %v1514 = vpop.f32.mrf.mxu0
    %v1515 = vadd.f32 0.0, %v1514
    %v1516 = vpop.f32.mrf.mxu0
    %1517 = vdwg.mxu0
    %1518 = vrot.lane.b32.xlu0 %v1234, 64
    %v1519 = vpop.permute.xlu0 %1518
    %v1521 = vsel %vm230, %v1390, 0
    %v1524 = vsel %vm559, %v1519, 0
    %1526 = vmatpush.bf16.msra.mxu0 0
    %1527 = vmatpush.bf16.msra.mxu0 0
    %1528 = vmatpush.bf16.msra.mxu0 0
    %1529 = vmatpush.bf16.msra.mxu0 0
    %1530 = vmatpush.bf16.msra.mxu0 0
    %1531 = vmatpush.bf16.msra.mxu0 0
    %1532 = vmatpush.bf16.msra.mxu0 0
    %1533 = vmatpush.bf16.msra.mxu0 %v1524
    %1534 = vmatmul.bf16.gmra.mxu0 %v1521
    %v1535 = vpop.f32.mrf.mxu0
    %v1536 = vadd.f32 0.0, %v1535
    %v1537 = vpop.f32.mrf.mxu0
    %1538 = vdwg.mxu0
    %1539 = vrot.lane.b32.xlu0 %v1258, 64
    %v1540 = vpop.permute.xlu0 %1539
    %v1542 = vsel %vm230, %v1391, 0
    %v1545 = vsel %vm559, %v1540, 0
    %1547 = vmatpush.bf16.msra.mxu0 0
    %1548 = vmatpush.bf16.msra.mxu0 0
    %1549 = vmatpush.bf16.msra.mxu0 0
    %1550 = vmatpush.bf16.msra.mxu0 0
    %1551 = vmatpush.bf16.msra.mxu0 0
    %1552 = vmatpush.bf16.msra.mxu0 0
    %1553 = vmatpush.bf16.msra.mxu0 0
    %1554 = vmatpush.bf16.msra.mxu0 %v1545
    %1555 = vmatmul.bf16.gmra.mxu0 %v1542
    %v1556 = vpop.f32.mrf.mxu0
    %v1557 = vadd.f32 0.0, %v1556
    %v1558 = vpop.f32.mrf.mxu0
    %1559 = vdwg.mxu0
    %1562 = vrot.lane.b32.xlu0 %v1452, 8
    %v1563 = vpop.permute.xlu0 %1562
    %1564 = vrot.lane.b32.xlu0 %v1473, 8
    %v1565 = vpop.permute.xlu0 %1564
    %1570 = vrot.lane.b32.xlu0 %v1494, 16
    %v1571 = vpop.permute.xlu0 %1570
    %1572 = vrot.lane.b32.xlu0 %v1515, 16
    %v1573 = vpop.permute.xlu0 %1572
    %1578 = vrot.lane.b32.xlu0 %v1536, 24
    %v1579 = vpop.permute.xlu0 %1578
    %1580 = vrot.lane.b32.xlu0 %v1557, 24
    %v1581 = vpop.permute.xlu0 %1580
    %v1584 = vsel %vm230, %v1410, %v1563
    %v1585 = vsel %vm230, %v1431, %v1565
    %v1586 = vsel %vm749, %v1584, %v1571
    %v1587 = vsel %vm749, %v1585, %v1573
    %v1588 = vsel %vm752, %v1586, %v1579
    %v1589 = vsel %vm752, %v1587, %v1581
    %v1590 = vpack.c.bf16 %v1589, %v1588
    %s1591 = scalar_lea.vmem %s7, 16
    %v1592 = vld [vmem:[%s1591] sm:$0xf]
    %v1593 = vld [vmem:[%s1591 + $0x4] sm:$0xf]
    %v1594 = vld [vmem:[%s1591 + $0x8] sm:$0xf]
    %v1595 = vld [vmem:[%s1591 + $0xc] sm:$0xf]
    %s1596 = scalar_lea.vmem %s8, 1
    %v1597 = vld [vmem:[%s1596] sm:$0x1]
    %v1599 = vperm.slane %v1597, 0
    %v1605 = vunpack.c.l.b16 %v1592
    %v1606 = vunpack.c.l.b16 %v1593
    %v1607 = vunpack.c.l.b16 %v1594
    %v1608 = vunpack.c.l.b16 %v1595
    %v1609 = vpack.c.b16 %v1606, %v1605
    %v1610 = vpack.c.b16 %v1608, %v1607
    %v1614 = vsel %vm89, %v1590, 0
    %1616 = vmatpush.bf16.msra.mxu0 0
    %1617 = vmatpush.bf16.msra.mxu0 0
    %1618 = vmatpush.bf16.msra.mxu0 0
    %1619 = vmatpush.bf16.msra.mxu0 0
    %1620 = vmatpush.bf16.msra.mxu0 0
    %1621 = vmatpush.bf16.msra.mxu0 0
    %1622 = vmatpush.bf16.msra.mxu0 %v1610
    %1623 = vmatpush.bf16.msra.mxu0 %v1609
    %1624 = vmatmul.bf16.gmra.mxu0 %v1614
    %v1625 = vpop.f32.mrf.mxu0
    %v1626 = vadd.f32 %v1599, %v1625
    %v1627 = vpop.f32.mrf.mxu0
    %v1628 = vadd.f32 %v1599, %v1627
    %1629 = vdwg.mxu0
    %v1630 = vadd.f32 %v1018, %v1626
    %v1631 = vadd.f32 %v1019, %v1628
    %s1632 = scalar_lea.vmem %s9, 1
    %v1633 = vld [vmem:[%s1632] sm:$0x1]
    %s1634 = scalar_lea.vmem %s10, 1
    %v1635 = vld [vmem:[%s1634] sm:$0x1]
    %v1636 = vsel %vm89, %v1630, 0.0
    %1637 = vadd.xlane.f32.xlu0 %v1636
    %v1638 = vpop.xlane.xlu0 %1637
    %v1639 = vsel %vm89, %v1631, 0.0
    %1640 = vadd.xlane.f32.xlu0 %v1639
    %v1641 = vpop.xlane.xlu0 %1640
    %v1642 = vmul.f32 %v1638, %v102
    %v1643 = vmul.f32 %v1641, %v102
    %v1644 = vsub.f32 %v1630, %v1642
    %v1645 = vsub.f32 %v1631, %v1643
    %v1646 = vmul.f32 %v1644, %v1644
    %v1647 = vmul.f32 %v1645, %v1645
    %v1648 = vsel %vm89, %v1646, 0.0
    %1649 = vadd.xlane.f32.xlu0 %v1648
    %v1650 = vpop.xlane.xlu0 %1649
    %v1651 = vsel %vm89, %v1647, 0.0
    %1652 = vadd.xlane.f32.xlu0 %v1651
    %v1653 = vpop.xlane.xlu0 %1652
    %v1654 = vmul.f32 %v1650, %v102
    %v1655 = vmul.f32 %v1653, %v102
    %v1656 = vadd.f32 %v1654, 1e-12
    %v1657 = vadd.f32 %v1655, 1e-12
    %v1658 = vrsqrt.pop %v1656
    %v1659 = vmul.f32 %v1658, %v1656
    %v1660 = vmul.f32 %v1659, %v1658
    %v1661 = vmul.f32 0.5, %v1660
    %v1662 = vsub.f32 1.5, %v1661
    %v1663 = vmul.f32 %v1658, %v1662
    %vm1664 = vweird.f32 %v1656
    %vm1665 = vweird.f32 %v1658
    %vm1666 = vmor %vm1664, %vm1665
    %v1667 = vsel %vm1666, %v1658, %v1663
    %v1668 = vrsqrt.pop %v1657
    %v1669 = vmul.f32 %v1668, %v1657
    %v1670 = vmul.f32 %v1669, %v1668
    %v1671 = vmul.f32 0.5, %v1670
    %v1672 = vsub.f32 1.5, %v1671
    %v1673 = vmul.f32 %v1668, %v1672
    %vm1674 = vweird.f32 %v1657
    %vm1675 = vweird.f32 %v1668
    %vm1676 = vmor %vm1674, %vm1675
    %v1677 = vsel %vm1676, %v1668, %v1673
    %v1678 = vmul.f32 %v1644, %v1667
    %v1679 = vmul.f32 %v1645, %v1677
    %v1681 = vperm.slane %v1633, 0
    %v1683 = vmul.f32 %v1678, %v1681
    %v1684 = vmul.f32 %v1679, %v1681
    %v1686 = vperm.slane %v1635, 0
    %v1688 = vadd.f32 %v1683, %v1686
    %v1689 = vadd.f32 %v1684, %v1686
    %v1690 = vpack.c.bf16 %v1689, %v1688
    %s1691 = scalar_lea.vmem %s11, 16
    %v1692 = vld [vmem:[%s1691] sm:$0xf]
    %v1693 = vld [vmem:[%s1691 + $0x4] sm:$0xf]
    %v1694 = vld [vmem:[%s1691 + $0x8] sm:$0xf]
    %v1695 = vld [vmem:[%s1691 + $0xc] sm:$0xf]
    %s1696 = scalar_lea.vmem %s12, 1
    %v1697 = vld [vmem:[%s1696] sm:$0x1]
    %v1699 = vperm.slane %v1697, 0
    %v1705 = vunpack.c.l.b16 %v1692
    %v1706 = vunpack.c.l.b16 %v1693
    %v1707 = vunpack.c.l.b16 %v1694
    %v1708 = vunpack.c.l.b16 %v1695
    %v1709 = vpack.c.b16 %v1706, %v1705
    %v1710 = vpack.c.b16 %v1708, %v1707
    %v1714 = vsel %vm89, %v1690, 0
    %1716 = vmatpush.bf16.msra.mxu0 0
    %1717 = vmatpush.bf16.msra.mxu0 0
    %1718 = vmatpush.bf16.msra.mxu0 0
    %1719 = vmatpush.bf16.msra.mxu0 0
    %1720 = vmatpush.bf16.msra.mxu0 0
    %1721 = vmatpush.bf16.msra.mxu0 0
    %1722 = vmatpush.bf16.msra.mxu0 %v1710
    %1723 = vmatpush.bf16.msra.mxu0 %v1709
    %1724 = vmatmul.bf16.gmra.mxu0 %v1714
    %v1725 = vpop.f32.mrf.mxu0
    %v1726 = vadd.f32 %v1699, %v1725
    %v1727 = vpop.f32.mrf.mxu0
    %v1728 = vadd.f32 %v1699, %v1727
    %1729 = vdwg.mxu0
    %v1730 = vmul.f32 %v1726, 0.5
    %v1731 = vmul.f32 %v1728, 0.5
    %v1732 = vmul.f32 %v1726, 0.044715
    %v1733 = vmul.f32 %v1728, 0.044715
    %v1734 = vmul.f32 %v1732, %v1726
    %v1735 = vmul.f32 %v1733, %v1728
    %v1736 = vmul.f32 %v1734, %v1726
    %v1737 = vmul.f32 %v1735, %v1728
    %v1738 = vadd.f32 %v1726, %v1736
    %v1739 = vadd.f32 %v1728, %v1737
    %v1740 = vmul.f32 %v1738, 0.7978846
    %v1741 = vmul.f32 %v1739, 0.7978846
    %v1742 = vtanh.pop %v1740
    %v1743 = vtanh.pop %v1741
    %v1744 = vadd.f32 %v1742, 1.0
    %v1745 = vadd.f32 %v1743, 1.0
    %v1746 = vmul.f32 %v1730, %v1744
    %v1747 = vmul.f32 %v1731, %v1745
    %v1748 = vpack.c.bf16 %v1747, %v1746
    %s1749 = scalar_lea.vmem %s13, 32
    %v1750 = vld [vmem:[%s1749] sm:$0xf]
    %v1751 = vld [vmem:[%s1749 + $0x4] sm:$0xf]
    %v1752 = vld [vmem:[%s1749 + $0x8] sm:$0xf]
    %v1753 = vld [vmem:[%s1749 + $0xc] sm:$0xf]
    %v1754 = vld [vmem:[%s1749 + $0x10] sm:$0xf]
    %v1755 = vld [vmem:[%s1749 + $0x14] sm:$0xf]
    %v1756 = vld [vmem:[%s1749 + $0x18] sm:$0xf]
    %v1757 = vld [vmem:[%s1749 + $0x1c] sm:$0xf]
    %s1758 = scalar_lea.vmem %s14, 1
    %v1759 = vld [vmem:[%s1758] sm:$0x1]
    %v1761 = vperm.slane %v1759, 0
    %v1771 = vunpack.c.l.b16 %v1750
    %v1772 = vunpack.c.l.b16 %v1751
    %v1773 = vunpack.c.l.b16 %v1752
    %v1774 = vunpack.c.l.b16 %v1753
    %v1775 = vunpack.c.l.b16 %v1754
    %v1776 = vunpack.c.l.b16 %v1755
    %v1777 = vunpack.c.l.b16 %v1756
    %v1778 = vunpack.c.l.b16 %v1757
    %v1779 = vpack.c.b16 %v1772, %v1771
    %v1780 = vpack.c.b16 %v1774, %v1773
    %v1781 = vpack.c.b16 %v1776, %v1775
    %v1782 = vpack.c.b16 %v1778, %v1777
    %v1788 = vsel %vm944, %v1748, 0
    %1790 = vmatpush.bf16.msra.mxu0 0
    %1791 = vmatpush.bf16.msra.mxu0 0
    %1792 = vmatpush.bf16.msra.mxu0 0
    %1793 = vmatpush.bf16.msra.mxu0 0
    %1794 = vmatpush.bf16.msra.mxu0 %v1782
    %1795 = vmatpush.bf16.msra.mxu0 %v1781
    %1796 = vmatpush.bf16.msra.mxu0 %v1780
    %1797 = vmatpush.bf16.msra.mxu0 %v1779
    %1798 = vmatmul.bf16.gmra.mxu0 %v1788
    %v1799 = vpop.f32.mrf.mxu0
    %v1800 = vadd.f32 %v1761, %v1799
    %v1801 = vpop.f32.mrf.mxu0
    %v1802 = vadd.f32 %v1761, %v1801
    %1803 = vdwg.mxu0
    %v1804 = vadd.f32 %v1688, %v1800
    %v1805 = vadd.f32 %v1689, %v1802
    %s1806 = scalar_lea.vmem %s15, 1
    %v1807 = vld [vmem:[%s1806] sm:$0x1]
    %s1808 = scalar_lea.vmem %s16, 1
    %v1809 = vld [vmem:[%s1808] sm:$0x1]
    %v1810 = vsel %vm89, %v1804, 0.0
    %1811 = vadd.xlane.f32.xlu0 %v1810
    %v1812 = vpop.xlane.xlu0 %1811
    %v1813 = vsel %vm89, %v1805, 0.0
    %1814 = vadd.xlane.f32.xlu0 %v1813
    %v1815 = vpop.xlane.xlu0 %1814
    %v1816 = vmul.f32 %v1812, %v102
    %v1817 = vmul.f32 %v1815, %v102
    %v1818 = vsub.f32 %v1804, %v1816
    %v1819 = vsub.f32 %v1805, %v1817
    %v1820 = vmul.f32 %v1818, %v1818
    %v1821 = vmul.f32 %v1819, %v1819
    %v1822 = vsel %vm89, %v1820, 0.0
    %1823 = vadd.xlane.f32.xlu0 %v1822
    %v1824 = vpop.xlane.xlu0 %1823
    %v1825 = vsel %vm89, %v1821, 0.0
    %1826 = vadd.xlane.f32.xlu0 %v1825
    %v1827 = vpop.xlane.xlu0 %1826
    %v1828 = vmul.f32 %v1824, %v102
    %v1829 = vmul.f32 %v1827, %v102
    %v1830 = vadd.f32 %v1828, 1e-12
    %v1831 = vadd.f32 %v1829, 1e-12
    %v1832 = vrsqrt.pop %v1830
    %v1833 = vmul.f32 %v1832, %v1830
    %v1834 = vmul.f32 %v1833, %v1832
    %v1835 = vmul.f32 0.5, %v1834
    %v1836 = vsub.f32 1.5, %v1835
    %v1837 = vmul.f32 %v1832, %v1836
    %vm1838 = vweird.f32 %v1830
    %vm1839 = vweird.f32 %v1832
    %vm1840 = vmor %vm1838, %vm1839
    %v1841 = vsel %vm1840, %v1832, %v1837
    %v1842 = vrsqrt.pop %v1831
    %v1843 = vmul.f32 %v1842, %v1831
    %v1844 = vmul.f32 %v1843, %v1842
    %v1845 = vmul.f32 0.5, %v1844
    %v1846 = vsub.f32 1.5, %v1845
    %v1847 = vmul.f32 %v1842, %v1846
    %vm1848 = vweird.f32 %v1831
    %vm1849 = vweird.f32 %v1842
    %vm1850 = vmor %vm1848, %vm1849
    %v1851 = vsel %vm1850, %v1842, %v1847
    %v1852 = vmul.f32 %v1818, %v1841
    %v1853 = vmul.f32 %v1819, %v1851
    %v1855 = vperm.slane %v1807, 0
    %v1857 = vmul.f32 %v1852, %v1855
    %v1858 = vmul.f32 %v1853, %v1855
    %v1860 = vperm.slane %v1809, 0
    %v1862 = vadd.f32 %v1857, %v1860
    %v1863 = vadd.f32 %v1858, %v1860
    %v1864 = vpack.c.bf16 %v1862, %v1862
    %v1865 = vpack.c.bf16 %v1863, %v1863
    %v1866 = vld [vmem:[%s17] sm:$0xf]
    %v1867 = vld [vmem:[%s17 + $0x4] sm:$0xf]
    %v1868 = vld [vmem:[%s17 + $0x8] sm:$0xf]
    %v1869 = vld [vmem:[%s17 + $0xc] sm:$0xf]
    %v1870 = vld [vmem:[%s18] sm:$0x1]
    %v1872 = vperm.slane %v1870, 0
    %v1876 = vunpack.c.l.b16 %v1864
    %v1877 = vunpack.c.l.b16 %v1865
    %v1878 = vrot.slane %v1877, 7
    %vm1879 = vcmask 1041409
    %v1880 = vsel %vm1879, %v1878, %v1876
    %v1881 = vpack.c.b16 %v1880, %v1880
    %v1886 = vunpack.c.l.b16 %v1866
    %v1887 = vunpack.c.l.b16 %v1867
    %v1888 = vunpack.c.l.b16 %v1868
    %v1889 = vunpack.c.l.b16 %v1869
    %v1890 = vpack.c.b16 %v1887, %v1886
    %v1891 = vpack.c.b16 %v1889, %v1888
    %v1895 = vsel %vm89, %v1881, 0
    %1897 = vmatpush.bf16.msra.mxu0 0
    %1898 = vmatpush.bf16.msra.mxu0 0
    %1899 = vmatpush.bf16.msra.mxu0 0
    %1900 = vmatpush.bf16.msra.mxu0 0
    %1901 = vmatpush.bf16.msra.mxu0 0
    %1902 = vmatpush.bf16.msra.mxu0 0
    %1903 = vmatpush.bf16.msra.mxu0 %v1891
    %1904 = vmatpush.bf16.msra.mxu0 %v1890
    %1905 = vmatmul.bf16.gmra.mxu0 %v1895
    %v1906 = vpop.f32.mrf.mxu0
    %v1907 = vadd.f32 %v1872, %v1906
    %v1908 = vpop.f32.mrf.mxu0
    %1909 = vdwg.mxu0
    %v1910 = vtanh.pop %v1907
    %v1911 = vpack.c.bf16 %v1910, %v1910
    %v1912 = vld [vmem:[%s19] sm:$0xf]
    %v1913 = vld [vmem:[%s19 + $0x4] sm:$0xf]
    %v1914 = vld [vmem:[%s19 + $0x8] sm:$0xf]
    %v1915 = vld [vmem:[%s19 + $0xc] sm:$0xf]
    %v1916 = vld [vmem:[%s20] sm:$0x1]
    %v1918 = vperm.slane %v1916, 0
    %v1924 = vunpack.c.l.b16 %v1912
    %v1925 = vunpack.c.l.b16 %v1913
    %v1926 = vunpack.c.l.b16 %v1914
    %v1927 = vunpack.c.l.b16 %v1915
    %v1928 = vpack.c.b16 %v1925, %v1924
    %v1929 = vpack.c.b16 %v1927, %v1926
    %v1933 = vsel %vm89, %v1911, 0
    %1935 = vmatpush.bf16.msra.mxu0 0
    %1936 = vmatpush.bf16.msra.mxu0 0
    %1937 = vmatpush.bf16.msra.mxu0 0
    %1938 = vmatpush.bf16.msra.mxu0 0
    %1939 = vmatpush.bf16.msra.mxu0 0
    %1940 = vmatpush.bf16.msra.mxu0 0
    %1941 = vmatpush.bf16.msra.mxu0 %v1929
    %1942 = vmatpush.bf16.msra.mxu0 %v1928
    %1943 = vmatmul.bf16.gmra.mxu0 %v1933
    %v1944 = vpop.f32.mrf.mxu0
    %v1945 = vadd.f32 %v1918, %v1944
    %v1946 = vpop.f32.mrf.mxu0
    %1947 = vdwg.mxu0
    %1948 = vst [vmem:[%s21] sm:$0x3] %v1945
    %v1949 = vlaneseq
    %v1950 = vand.u32 %v1949, 127
    %v1951 = vlaneseq
    %v1952 = vshrl.u32 %v1951, 7
    %vm1953 = vcmp.lt.s32.totalorder %v1950, 5
    %v1954 = vsel %vm1953, %v1945, -1e+09
    %vm1955 = vcmask 1041408
    %v1956 = vsel %vm1955, %v1954, -inf
    %1957 = vmax.xlane.f32.xlu0 %v1956
    %v1958 = vpop.xlane.xlu0 %1957
    %v1959 = vsub.f32 %v1954, %v1958
    %v1960 = vmul.f32 %v1959, 1.442695
    %v1961 = vpow.pop %v1960
    %v1962 = vsel %vm1955, %v1961, 0.0
    %1963 = vadd.xlane.f32.xlu0 %v1962
    %v1964 = vpop.xlane.xlu0 %1963
    %v1965 = vlog2.pop %v1964
    %v1966 = vmul.f32 %v1965, 0.6931472
    %v1967 = vadd.f32 %v1958, %v1966
    %vm1968 = vcmp.eq.s32.totalorder %v1952, 0
    %s1969 = sld [smem:[#allocation2]]
    %v1970 = vstv %s1969
    %vm1971 = vcmp.eq.s32.totalorder %v1950, %v1970
    %vm1972 = vmand %vm1968, %vm1971
    %v1973 = vsel %vm1972, 1.0, 0.0
    %vm1974 = vcmp.eq.s32.totalorder %v1952, 1
    %s1975 = sld [smem:[#allocation2 + $0x1]]
    %v1976 = vstv %s1975
    %vm1977 = vcmp.eq.s32.totalorder %v1950, %v1976
    %vm1978 = vmand %vm1974, %vm1977
    %v1979 = vsel %vm1978, 1.0, %v1973
    %v1980 = vmul.f32 %v1979, %v1954
    %v1981 = vsel %vm1955, %v1980, 0.0
    %1982 = vadd.xlane.f32.xlu0 %v1981
    %v1983 = vpop.xlane.xlu0 %1982
    %v1984 = vsub.f32 %v1967, %v1983
    %vm1985 = vcmask 1024
    %v1986 = vsel %vm1985, %v1984, 0.0
    %1987 = vadd.xlane.f32.xlu0 %v1986
    %v1988 = vpop.xlane.xlu0 %1987
    %v1989 = vrot.slane %v1988, 4
    %v1990 = vadd.f32 %v1988, %v1989
    %v1991 = vrot.slane %v1990, 2
    %v1992 = vadd.f32 %v1990, %v1991
    %v1993 = vrot.slane %v1992, 1
    %v1994 = vadd.f32 %v1992, %v1993
    %s1995 = vtos %v1994
    %s1996 = smul.f32 %s1995, 0.5
    %s1997 = scalar_lea.smem [#allocation5], 0
    %1998 = sst [smem:[%s1997]] %s1996
    // Predicated region
    $region90: #{bert_forward.1} parent=1 // pred_check
      _
    $region91: #{bert_forward.1} parent=1 // pred_check_branch
      %2000 = sbr.rel (0) target = $region93
    $region92: #{bert_forward.1} parent=1 // pred_region
      _
    $region93: #{bert_forward.1} parent=1 // pred_fallthru
      _
    // Predicated region
    $region94: #{bert_forward.1} parent=1 // pred_check
      _
    $region95: #{bert_forward.1} parent=1 // pred_check_branch
      %2002 = sbr.rel (0) target = $region97
    $region96: #{bert_forward.1} parent=1 // pred_region
      %2004 = vsyncadd [#allocation3], 0
      %s2006 = sshll.u32 %s22, 4
      %s2007 = int_to_ptr.hbm [resolvable:$true] %s2006
      %2009 = dma.smem_to_hbm [#allocation5], 16, %s2007, [#allocation3]
    $region97: #{bert_forward.1} parent=1 // pred_fallthru
      _
    // Predicated region
    $region98: #{bert_forward.1} parent=1 // pred_check
      _
    $region99: #{bert_forward.1} parent=1 // pred_check_branch
      %2011 = sbr.rel (0) target = $region101
    $region100: #{bert_forward.1} parent=1 // pred_region
      _
    $region101: #{bert_forward.1} parent=1 // pred_fallthru
      _
    // Predicated region
    $region102: #{bert_forward.1} parent=1 // pred_check
      _
    $region103: #{bert_forward.1} parent=1 // pred_check_branch
      %2013 = sbr.rel (0) target = $region105
    $region104: #{bert_forward.1} parent=1 // pred_region
      %2015 = dma.done [#allocation3], 16
    $region105: #{bert_forward.1} parent=1 // pred_fallthru
      _
    %2016 = sfence
    %2017 = vsyncpa [#allocation3], 1
    %2018 = vsyncpa [#allocation4], 1

</llo_original>
